<compile_context>
chip_gen: v5e
topology: v5e:2x2
jax: 0.10.0
libtpu: 0.0.40
codegen_flags: <defaults>
</compile_context>

<pallas_src>
import jax
import jax.numpy as jnp
from jax import lax
from jax.experimental import pallas as pl
from jax.experimental.pallas import tpu as pltpu

# ----------------------- tiny synthetic DINOv2-like config -------------------
IMG = 16            # preprocess resize target (stands in for 224)
PATCH = 8           # patch size (stands in for 14)
EMBED_DIM = 32      # dino_dim (stands in for 768)
DEPTH = 2
NUM_HEADS = 4
HEAD_DIM = EMBED_DIM // NUM_HEADS
MLP_HIDDEN = 4 * EMBED_DIM                 # 128 -> lane-dense hidden
OUT_DIM = 16        # out_dim != dino_dim -> fc is a real Linear
OUT_PAD = ((OUT_DIM + 127) // 128) * 128   # lane-dense padded output width (128)
NUM_PATCHES = (IMG // PATCH) ** 2
NUM_TOKENS = NUM_PATCHES + 1               # + cls token
T_PAD = ((NUM_TOKENS + 7) // 8) * 8        # tokens padded to sublane multiple (8)
PP3 = PATCH * PATCH * 3
LN_EPS = 1e-6

BATCH_TILE = 2                             # images per grid step (amortizes weight DMA)
M_ROWS = BATCH_TILE * T_PAD                # resident token rows per tile

IMAGENET_MEAN = jnp.array([0.485, 0.456, 0.406], jnp.float32)
IMAGENET_STD = jnp.array([0.229, 0.224, 0.225], jnp.float32)


# ------------------------------ fused encoder kernel -------------------------
def _ln(x, g, b):
    mean = jnp.mean(x, axis=-1, keepdims=True)
    xc = x - mean
    var = jnp.mean(xc * xc, axis=-1, keepdims=True)
    return xc * lax.rsqrt(var + LN_EPS) * g + b


def _encoder_kernel(tok_ref, vec_ref, qkvw_ref, qkvb_ref, projw_ref,
                    fc1w_ref, fc1b_ref, fc2w_ref,
                    normf_ref, fcw_ref, fcb_ref,
                    out_ref, x_sc, attn_sc):
    d = pl.program_id(1)
    T, D, dh = NUM_TOKENS, EMBED_DIM, HEAD_DIM

    # ---- depth 0 prologue: load this batch tile's tokens into the resident scratch ----
    @pl.when(d == 0)
    def _():
        x_sc[...] = tok_ref[...]
        attn_sc[...] = jnp.zeros_like(attn_sc)   # keep pad rows deterministic

    # per-block packed vectors: [n1g, n1b, proj_b*ls1, n2g, n2b, fc2_b*ls2]
    vecs = vec_ref[...]                                                       # (6, D)
    n1g, n1b, pjb = vecs[0:1, :], vecs[1:2, :], vecs[2:3, :]
    n2g, n2b, f2b = vecs[3:4, :], vecs[4:5, :], vecs[5:6, :]

    x = x_sc[...]                                                             # (M_ROWS, D) f32

    # ---- attention branch: fused QKV matmul (bf16 weights, f32 accum) ----
    h = _ln(x, n1g, n1b).astype(jnp.bfloat16)
    qkv = jnp.dot(h, qkvw_ref[...],
                  preferred_element_type=jnp.float32) + qkvb_ref[...]         # (M_ROWS, 3D) f32
    # attention scale dh^-0.5 is already folded into the q columns of qkvw/qkvb.
    for bb in range(BATCH_TILE):                                              # per image in tile
        rs = slice(bb * T_PAD, bb * T_PAD + T)                                # real token rows
        for hh in range(NUM_HEADS):                                           # per-head static slices
            qh = qkv[rs, hh * dh:(hh + 1) * dh]
            kh = qkv[rs, D + hh * dh:D + (hh + 1) * dh]
            vh = qkv[rs, 2 * D + hh * dh:2 * D + (hh + 1) * dh]
            s = lax.dot_general(qh, kh, (((1,), (1,)), ((), ())),
                                preferred_element_type=jnp.float32)           # (T, T)
            s = s - jnp.max(s, axis=-1, keepdims=True)
            p = jnp.exp(s)
            p = p * pl.reciprocal(jnp.sum(p, axis=-1, keepdims=True), approx=True)
            attn_sc[rs, hh * dh:(hh + 1) * dh] = jnp.dot(
                p, vh, preferred_element_type=jnp.float32)

    # proj (+ folded LayerScale) + residual
    o = jnp.dot(attn_sc[...].astype(jnp.bfloat16), projw_ref[...],
                preferred_element_type=jnp.float32) + pjb
    x = x + o

    # ---- MLP branch ----
    hm = _ln(x, n2g, n2b).astype(jnp.bfloat16)
    h1 = jnp.dot(hm, fc1w_ref[...], preferred_element_type=jnp.float32) + fc1b_ref[...]
    # TODO(synk): PyTorch nn.GELU is exact (erf); tanh approximation used here.
    h1 = jax.nn.gelu(h1, approximate=True).astype(jnp.bfloat16)
    h2 = jnp.dot(h1, fc2w_ref[...], preferred_element_type=jnp.float32) + f2b
    x = x + h2                                                                # ls2 folded in fc2
    x_sc[...] = x

    # ---- last depth step: final LN on cls tokens + Linear(dino_dim, out_dim) ----
    @pl.when(d == pl.num_programs(1) - 1)
    def _():
        nf = normf_ref[...]                                                   # (2, D)
        for bb in range(BATCH_TILE):
            cls_row = x[bb * T_PAD:bb * T_PAD + 1, :]                         # (1, D)
            clsn = _ln(cls_row, nf[0:1, :], nf[1:2, :]).astype(jnp.bfloat16)
            out_ref[bb:bb + 1, :] = jnp.dot(
                clsn, fcw_ref[...], preferred_element_type=jnp.float32) + fcb_ref[...]


# ---------------------------- parameters (synthetic) --------------------------
def init_params(key):
    ks = iter(jax.random.split(key, 64))

    def rnd(shape, scale=0.02):
        return scale * jax.random.normal(next(ks), shape, jnp.float32)

    params = {
        "patch_w": rnd((PP3, EMBED_DIM)),
        "patch_b": jnp.zeros((EMBED_DIM,), jnp.float32),
        "cls_token": rnd((1, 1, EMBED_DIM)),
        "pos_embed": rnd((1, NUM_TOKENS, EMBED_DIM)),
        "norm_g": jnp.ones((EMBED_DIM,), jnp.float32),
        "norm_b": jnp.zeros((EMBED_DIM,), jnp.float32),
    }
    # fc: reset_parameters() -> xavier_uniform weight, zero bias
    limit = (6.0 / (EMBED_DIM + OUT_DIM)) ** 0.5
    params["fc_w"] = jax.random.uniform(next(ks), (EMBED_DIM, OUT_DIM),
                                        jnp.float32, -limit, limit)
    params["fc_b"] = jnp.zeros((OUT_DIM,), jnp.float32)

    blocks = []
    for _ in range(DEPTH):
        blocks.append({
            "norm1_g": jnp.ones((EMBED_DIM,), jnp.float32),
            "norm1_b": jnp.zeros((EMBED_DIM,), jnp.float32),
            "qkv_w": rnd((EMBED_DIM, 3 * EMBED_DIM)),
            "qkv_b": jnp.zeros((3 * EMBED_DIM,), jnp.float32),
            "proj_w": rnd((EMBED_DIM, EMBED_DIM)),
            "proj_b": jnp.zeros((EMBED_DIM,), jnp.float32),
            # LayerScale (real DINOv2 hub ckpts init ~1e-5; 1.0 keeps the branch visible here)
            "ls1": jnp.ones((EMBED_DIM,), jnp.float32),
            "norm2_g": jnp.ones((EMBED_DIM,), jnp.float32),
            "norm2_b": jnp.zeros((EMBED_DIM,), jnp.float32),
            "fc1_w": rnd((EMBED_DIM, MLP_HIDDEN)),
            "fc1_b": jnp.zeros((MLP_HIDDEN,), jnp.float32),
            "fc2_w": rnd((MLP_HIDDEN, EMBED_DIM)),
            "fc2_b": jnp.zeros((EMBED_DIM,), jnp.float32),
            "ls2": jnp.ones((EMBED_DIM,), jnp.float32),
        })
    params["blocks"] = blocks
    return params


# --------------------------------- forward -----------------------------------
def dinov2_encoder_forward(params, image_nchw):
    B = image_nchw.shape[0]
    assert B % BATCH_TILE == 0, "batch must be a multiple of BATCH_TILE"

    # --- preprocess: Resize((IMG, IMG)); Normalize is folded into patch-embed below ---
    x = jnp.transpose(image_nchw.astype(jnp.float32), (0, 2, 3, 1))            # NHWC
    # TODO(synk): torchvision Resize is antialiased bilinear; plain bilinear used here.
    x = jax.image.resize(x, (B, IMG, IMG, 3), method="bilinear")

    # im2col for Conv2d(3, D, k=PATCH, s=PATCH): (B, NP, PATCH*PATCH*3), channel fastest
    gh = gw = IMG // PATCH
    patches = x.reshape(B, gh, PATCH, gw, PATCH, 3)
    patches = jnp.transpose(patches, (0, 1, 3, 2, 4, 5)).reshape(B, NUM_PATCHES, PP3)

    # --- fold ImageNet Normalize into the patch-embed matmul (w'=w/std, b'=b-(mean/std)@w) ---
    svec = jnp.tile(1.0 / IMAGENET_STD, PATCH * PATCH)                         # (PP3,)
    mvec = jnp.tile(IMAGENET_MEAN, PATCH * PATCH)
    pw = params["patch_w"] * svec[:, None]                                     # (PP3, D)
    pb = params["patch_b"] - (mvec * svec) @ params["patch_w"]                 # (D,)

    # patch embed as a plain XLA matmul (per review: keep it out of the resident VMEM loop)
    ptok = patches @ pw + pb                                                   # (B, NP, D)
    cls = jnp.broadcast_to(params["cls_token"], (B, 1, EMBED_DIM))
    tokens = jnp.concatenate([cls, ptok], axis=1) + params["pos_embed"]        # (B, T, D)
    tokens = jnp.pad(tokens, ((0, 0), (0, T_PAD - NUM_TOKENS), (0, 0)))        # sublane-pad rows
    tokens2d = tokens.reshape(B * T_PAD, EMBED_DIM)                            # (B*T_PAD, D)

    # --- stack per-block weights on a leading DEPTH axis (streamed by index_map) ---
    blocks = params["blocks"]
    scale = float(HEAD_DIM) ** -0.5

    def stk(fn):
        return jnp.stack([fn(blk) for blk in blocks], axis=0)

    # fused qkv weight/bias with the attention scale folded into the q columns
    def _qkvw(blk):
        return blk["qkv_w"].at[:, :EMBED_DIM].multiply(scale)

    def _qkvb(blk):
        return blk["qkv_b"].at[:EMBED_DIM].multiply(scale).reshape(1, 3 * EMBED_DIM)

    qkvw = stk(_qkvw).astype(jnp.bfloat16)                                     # (DEPTH, D, 3D)
    qkvb = stk(_qkvb)                                                          # (DEPTH, 1, 3D) f32
    # LayerScale folded into proj / fc2 weights & biases
    projw = stk(lambda blk: blk["proj_w"] * blk["ls1"][None, :]).astype(jnp.bfloat16)
    fc1w = stk(lambda blk: blk["fc1_w"]).astype(jnp.bfloat16)
    fc1b = stk(lambda blk: blk["fc1_b"].reshape(1, MLP_HIDDEN))
    fc2w = stk(lambda blk: blk["fc2_w"] * blk["ls2"][None, :]).astype(jnp.bfloat16)
    vec = stk(lambda blk: jnp.stack(
        [blk["norm1_g"], blk["norm1_b"], blk["proj_b"] * blk["ls1"],
         blk["norm2_g"], blk["norm2_b"], blk["fc2_b"] * blk["ls2"]], axis=0))  # (DEPTH, 6, D)

    normf = jnp.stack([params["norm_g"], params["norm_b"]], axis=0)            # (2, D)
    # lane-dense (128-wide) padded fc so the single HBM store per tile is an unmasked vst
    fcw = jnp.zeros((EMBED_DIM, OUT_PAD), jnp.float32).at[:, :OUT_DIM].set(
        params["fc_w"]).astype(jnp.bfloat16)
    fcb = jnp.zeros((1, OUT_PAD), jnp.float32).at[:, :OUT_DIM].set(params["fc_b"])

    wmap3 = lambda b, d: (d, 0, 0)         # per-depth streamed weights
    cmap2 = lambda b, d: (0, 0)            # resident (fetched once) 2-D operands

    out = pl.pallas_call(
        _encoder_kernel,
        grid=(B // BATCH_TILE, DEPTH),
        in_specs=[
            pl.BlockSpec((M_ROWS, EMBED_DIM), lambda b, d: (b, 0)),            # batch-tile tokens
            pl.BlockSpec((None, 6, EMBED_DIM), wmap3),                         # packed LN/bias vecs
            pl.BlockSpec((None, EMBED_DIM, 3 * EMBED_DIM), wmap3),             # fused qkv W (bf16)
            pl.BlockSpec((None, 1, 3 * EMBED_DIM), wmap3),                     # qkv bias
            pl.BlockSpec((None, EMBED_DIM, EMBED_DIM), wmap3),                 # proj W (ls1 folded)
            pl.BlockSpec((None, EMBED_DIM, MLP_HIDDEN), wmap3),                # fc1 W (bf16)
            pl.BlockSpec((None, 1, MLP_HIDDEN), wmap3),                        # fc1 bias
            pl.BlockSpec((None, MLP_HIDDEN, EMBED_DIM), wmap3),                # fc2 W (ls2 folded)
            pl.BlockSpec((2, EMBED_DIM), cmap2),                               # final norm g/b
            pl.BlockSpec((EMBED_DIM, OUT_PAD), cmap2),                         # fc W (padded, bf16)
            pl.BlockSpec((1, OUT_PAD), cmap2),                                 # fc bias (padded)
        ],
        out_specs=pl.BlockSpec((None, BATCH_TILE, OUT_PAD), lambda b, d: (b, 0, 0)),
        out_shape=jax.ShapeDtypeStruct((B // BATCH_TILE, BATCH_TILE, OUT_PAD), jnp.float32),
        scratch_shapes=[pltpu.VMEM((M_ROWS, EMBED_DIM), jnp.float32),          # resident tokens
                        pltpu.VMEM((M_ROWS, EMBED_DIM), jnp.float32)],         # attention output
        compiler_params=pltpu.CompilerParams(
            dimension_semantics=("parallel", "arbitrary"),
            vmem_limit_bytes=32 * 1024 * 1024),
    )(tokens2d, vec, qkvw, qkvb, projw, fc1w, fc1b, fc2w, normf, fcw, fcb)

    return out.reshape(B, OUT_PAD)[:, :OUT_DIM]


# --------------------------- pure-JAX reference (sanity) ----------------------
def _reference_forward(params, image_nchw):
    B = image_nchw.shape[0]
    x = jnp.transpose(image_nchw.astype(jnp.float32), (0, 2, 3, 1))
    x = jax.image.resize(x, (B, IMG, IMG, 3), method="bilinear")
    x = (x - IMAGENET_MEAN) / IMAGENET_STD
    gh = gw = IMG // PATCH
    p = x.reshape(B, gh, PATCH, gw, PATCH, 3).transpose(0, 1, 3, 2, 4, 5)
    p = p.reshape(B, NUM_PATCHES, PP3)
    tok = p @ params["patch_w"] + params["patch_b"]
    cls = jnp.broadcast_to(params["cls_token"], (B, 1, EMBED_DIM))
    xt = jnp.concatenate([cls, tok], axis=1) + params["pos_embed"]

    def ln(v, g, b):
        mu = v.mean(-1, keepdims=True)
        vc = v - mu
        var = (vc * vc).mean(-1, keepdims=True)
        return vc * lax.rsqrt(var + LN_EPS) * g + b

    for blk in params["blocks"]:
        h = ln(xt, blk["norm1_g"], blk["norm1_b"])
        qkv = (h @ blk["qkv_w"] + blk["qkv_b"]).reshape(B, NUM_TOKENS, 3, NUM_HEADS, HEAD_DIM)
        q = qkv[:, :, 0].transpose(0, 2, 1, 3)
        k = qkv[:, :, 1].transpose(0, 2, 1, 3)
        v = qkv[:, :, 2].transpose(0, 2, 1, 3)
        s = jnp.einsum("bhqd,bhkd->bhqk", q, k) * (HEAD_DIM ** -0.5)
        pa = jax.nn.softmax(s, axis=-1)
        o = jnp.einsum("bhqk,bhkd->bhqd", pa, v).transpose(0, 2, 1, 3)
        o = o.reshape(B, NUM_TOKENS, EMBED_DIM)
        xt = xt + blk["ls1"] * (o @ blk["proj_w"] + blk["proj_b"])
        h = ln(xt, blk["norm2_g"], blk["norm2_b"])
        h = jax.nn.gelu(h @ blk["fc1_w"] + blk["fc1_b"], approximate=True)
        xt = xt + blk["ls2"] * (h @ blk["fc2_w"] + blk["fc2_b"])
    cls_tok = ln(xt, params["norm_g"], params["norm_b"])[:, 0, :]
    return cls_tok @ params["fc_w"] + params["fc_b"]


# ----------------------------------- main -------------------------------------
if __name__ == "__main__":
    key = jax.random.PRNGKey(0)
    pkey, xkey = jax.random.split(key)
    params = init_params(pkey)
    # PyTorch-style NCHW input image batch (B divisible by BATCH_TILE, >= 2 tiles).
    image = jax.random.uniform(xkey, (4, 3, 32, 32), jnp.float32)

    fwd = jax.jit(dinov2_encoder_forward)
    out = fwd(params, image)
    jax.block_until_ready(out)
    assert out.shape == (4, OUT_DIM) and out.dtype == jnp.float32

    # logic sanity-check against a plain XLA f32 reference (tolerance absorbs bf16
    # weight quantization + approx reciprocal in the kernel).
    ref = jax.jit(_reference_forward)(params, image)
    jax.block_until_ready(ref)
    max_diff = float(jnp.max(jnp.abs(out - ref)))
    assert bool(jnp.allclose(out, ref, rtol=5e-2, atol=5e-2)), f"max diff {max_diff}"

    print("KERNEL_OK")
</pallas_src>

<mosaic_0001>
module attributes {stable_mosaic.version = 11 : i64} {
  func.func @_encoder_kernel(%arg0: i32, %arg1: i32, %arg2: memref<16x32xf32, #tpu.memory_space<vmem>>, %arg3: memref<1x6x32xf32, #tpu.memory_space<vmem>>, %arg4: memref<1x32x96xbf16, #tpu.memory_space<vmem>>, %arg5: memref<1x1x96xf32, #tpu.memory_space<vmem>>, %arg6: memref<1x32x32xbf16, #tpu.memory_space<vmem>>, %arg7: memref<1x32x128xbf16, #tpu.memory_space<vmem>>, %arg8: memref<1x1x128xf32, #tpu.memory_space<vmem>>, %arg9: memref<1x128x32xbf16, #tpu.memory_space<vmem>>, %arg10: memref<2x32xf32, #tpu.memory_space<vmem>>, %arg11: memref<32x128xbf16, #tpu.memory_space<vmem>>, %arg12: memref<1x128xf32, #tpu.memory_space<vmem>>, %arg13: memref<1x2x128xf32, #tpu.memory_space<vmem>>, %arg14: memref<16x32xf32, #tpu.memory_space<vmem>>, %arg15: memref<16x32xf32, #tpu.memory_space<vmem>>) attributes {dimension_semantics = [#tpu.dimension_semantics<parallel>, #tpu.dimension_semantics<arbitrary>], iteration_bounds = array<i64: 2, 2>, scalar_prefetch = 0 : i64, scratch_operands = 2 : i64, tpu.core_type = #tpu.core_type<tc>, window_params = [{transform_indices = @transform_0, window_bounds = array<i64: 16, 32>}, {transform_indices = @transform_1, window_bounds = array<i64: 1, 6, 32>}, {transform_indices = @transform_2, window_bounds = array<i64: 1, 32, 96>}, {transform_indices = @transform_3, window_bounds = array<i64: 1, 1, 96>}, {transform_indices = @transform_4, window_bounds = array<i64: 1, 32, 32>}, {transform_indices = @transform_5, window_bounds = array<i64: 1, 32, 128>}, {transform_indices = @transform_6, window_bounds = array<i64: 1, 1, 128>}, {transform_indices = @transform_7, window_bounds = array<i64: 1, 128, 32>}, {pipeline_mode = #tpu.pipeline_mode<synchronous>, transform_indices = @transform_8, window_bounds = array<i64: 2, 32>}, {pipeline_mode = #tpu.pipeline_mode<synchronous>, transform_indices = @transform_9, window_bounds = array<i64: 32, 128>}, {pipeline_mode = #tpu.pipeline_mode<synchronous>, transform_indices = @transform_10, window_bounds = array<i64: 1, 128>}, {transform_indices = @transform_11, window_bounds = array<i64: 1, 2, 128>}]} {
    %c0_i32 = arith.constant 0 : i32
    %0 = arith.cmpi eq, %arg1, %c0_i32 : i32
    %1 = arith.extui %0 : i1 to i32
    %c0_i32_0 = arith.constant 0 : i32
    %2 = arith.cmpi ne, %1, %c0_i32_0 : i32
    scf.if %2 {
      %c0_90 = arith.constant 0 : index
      %c0_91 = arith.constant 0 : index
      %228 = vector.load %arg2[%c0_90, %c0_91] : memref<16x32xf32, #tpu.memory_space<vmem>>, vector<16x32xf32>
      %c0_92 = arith.constant 0 : index
      %c0_93 = arith.constant 0 : index
      %229 = vector.load %arg14[%c0_92, %c0_93] : memref<16x32xf32, #tpu.memory_space<vmem>>, vector<16x32xf32>
      tpu.vector_store %arg14[%c0_92, %c0_93], %228 {strides = array<i32>} : memref<16x32xf32, #tpu.memory_space<vmem>>, vector<16x32xf32>,
      %cst_94 = arith.constant 0.000000e+00 : f32
      %230 = vector.broadcast %cst_94 : f32 to vector<16x32xf32>
      %c0_95 = arith.constant 0 : index
      %c0_96 = arith.constant 0 : index
      %231 = vector.load %arg15[%c0_95, %c0_96] : memref<16x32xf32, #tpu.memory_space<vmem>>, vector<16x32xf32>
      tpu.vector_store %arg15[%c0_95, %c0_96], %230 {strides = array<i32>} : memref<16x32xf32, #tpu.memory_space<vmem>>, vector<16x32xf32>,
    } else {
    }
    %c0 = arith.constant 0 : index
    %c0_1 = arith.constant 0 : index
    %c0_2 = arith.constant 0 : index
    %3 = vector.load %arg3[%c0, %c0_1, %c0_2] : memref<1x6x32xf32, #tpu.memory_space<vmem>>, vector<1x6x32xf32>
    %4 = vector.shape_cast %3 : vector<1x6x32xf32> to vector<6x32xf32>
    %5 = vector.extract_strided_slice %4 {offsets = [0, 0], sizes = [1, 32], strides = [1, 1]} : vector<6x32xf32> to vector<1x32xf32>
    %6 = vector.extract_strided_slice %4 {offsets = [1, 0], sizes = [1, 32], strides = [1, 1]} : vector<6x32xf32> to vector<1x32xf32>
    %7 = vector.extract_strided_slice %4 {offsets = [2, 0], sizes = [1, 32], strides = [1, 1]} : vector<6x32xf32> to vector<1x32xf32>
    %8 = vector.extract_strided_slice %4 {offsets = [3, 0], sizes = [1, 32], strides = [1, 1]} : vector<6x32xf32> to vector<1x32xf32>
    %9 = vector.extract_strided_slice %4 {offsets = [4, 0], sizes = [1, 32], strides = [1, 1]} : vector<6x32xf32> to vector<1x32xf32>
    %10 = vector.extract_strided_slice %4 {offsets = [5, 0], sizes = [1, 32], strides = [1, 1]} : vector<6x32xf32> to vector<1x32xf32>
    %c0_3 = arith.constant 0 : index
    %c0_4 = arith.constant 0 : index
    %11 = vector.load %arg14[%c0_3, %c0_4] : memref<16x32xf32, #tpu.memory_space<vmem>>, vector<16x32xf32>
    %cst = arith.constant dense<0.000000e+00> : vector<16xf32>
    %12 = vector.multi_reduction <add>, %11, %cst [1] : vector<16x32xf32> to vector<16xf32>
    %13 = vector.shape_cast %12 : vector<16xf32> to vector<16x1xf32>
    %cst_5 = arith.constant 3.200000e+01 : f32
    %14 = vector.broadcast %cst_5 : f32 to vector<16x1xf32>
    %15 = arith.divf %13, %14 : vector<16x1xf32>
    %16 = vector.broadcast %15 : vector<16x1xf32> to vector<16x32xf32>
    %17 = arith.subf %11, %16 : vector<16x32xf32>
    %18 = arith.mulf %17, %17 : vector<16x32xf32>
    %cst_6 = arith.constant dense<0.000000e+00> : vector<16xf32>
    %19 = vector.multi_reduction <add>, %18, %cst_6 [1] : vector<16x32xf32> to vector<16xf32>
    %20 = vector.shape_cast %19 : vector<16xf32> to vector<16x1xf32>
    %cst_7 = arith.constant 3.200000e+01 : f32
    %21 = vector.broadcast %cst_7 : f32 to vector<16x1xf32>
    %22 = arith.divf %20, %21 : vector<16x1xf32>
    %cst_8 = arith.constant 9.99999997E-7 : f32
    %23 = vector.broadcast %cst_8 : f32 to vector<16x1xf32>
    %24 = arith.addf %22, %23 : vector<16x1xf32>
    %25 = math.rsqrt %24 : vector<16x1xf32>
    %26 = vector.broadcast %25 : vector<16x1xf32> to vector<16x32xf32>
    %27 = arith.mulf %17, %26 : vector<16x32xf32>
    %28 = vector.broadcast %5 : vector<1x32xf32> to vector<16x32xf32>
    %29 = arith.mulf %27, %28 : vector<16x32xf32>
    %30 = vector.broadcast %6 : vector<1x32xf32> to vector<16x32xf32>
    %31 = arith.addf %29, %30 : vector<16x32xf32>
    %32 = arith.truncf %31 : vector<16x32xf32> to vector<16x32xbf16>
    %c0_9 = arith.constant 0 : index
    %c0_10 = arith.constant 0 : index
    %c0_11 = arith.constant 0 : index
    %33 = vector.load %arg4[%c0_9, %c0_10, %c0_11] : memref<1x32x96xbf16, #tpu.memory_space<vmem>>, vector<1x32x96xbf16>
    %34 = vector.shape_cast %33 : vector<1x32x96xbf16> to vector<32x96xbf16>
    %cst_12 = arith.constant dense<0.000000e+00> : vector<16x96xf32>
    %35 = tpu.matmul %32, %34, %cst_12 {dimension_numbers = #tpu.dot_dimension_numbers<[1], [0], [0], [1], [0, 0, 1, 1], [], []>} : vector<16x32xbf16>, vector<32x96xbf16>, vector<16x96xf32> -> vector<16x96xf32>
    %c0_13 = arith.constant 0 : index
    %c0_14 = arith.constant 0 : index
    %c0_15 = arith.constant 0 : index
    %36 = vector.load %arg5[%c0_13, %c0_14, %c0_15] : memref<1x1x96xf32, #tpu.memory_space<vmem>>, vector<1x1x96xf32>
    %37 = vector.shape_cast %36 : vector<1x1x96xf32> to vector<1x96xf32>
    %38 = vector.broadcast %37 : vector<1x96xf32> to vector<16x96xf32>
    %39 = arith.addf %35, %38 : vector<16x96xf32>
    %40 = vector.extract_strided_slice %39 {offsets = [0, 0], sizes = [5, 8], strides = [1, 1]} : vector<16x96xf32> to vector<5x8xf32>
    %41 = vector.extract_strided_slice %39 {offsets = [0, 32], sizes = [5, 8], strides = [1, 1]} : vector<16x96xf32> to vector<5x8xf32>
    %42 = vector.extract_strided_slice %39 {offsets = [0, 64], sizes = [5, 8], strides = [1, 1]} : vector<16x96xf32> to vector<5x8xf32>
    %cst_16 = arith.constant dense<0.000000e+00> : vector<5x5xf32>
    %43 = tpu.matmul %40, %41, %cst_16 {dimension_numbers = #tpu.dot_dimension_numbers<[1], [1], [0], [0], [0, 0, 1, 0], [], []>} : vector<5x8xf32>, vector<5x8xf32>, vector<5x5xf32> -> vector<5x5xf32>
    %cst_17 = arith.constant dense<0xFF800000> : vector<5xf32>
    %44 = vector.multi_reduction <maximumf>, %43, %cst_17 [1] : vector<5x5xf32> to vector<5xf32>
    %45 = vector.shape_cast %44 : vector<5xf32> to vector<5x1xf32>
    %46 = vector.broadcast %45 : vector<5x1xf32> to vector<5x5xf32>
    %47 = arith.subf %43, %46 : vector<5x5xf32>
    %48 = math.exp %47 : vector<5x5xf32>
    %cst_18 = arith.constant dense<0.000000e+00> : vector<5xf32>
    %49 = vector.multi_reduction <add>, %48, %cst_18 [1] : vector<5x5xf32> to vector<5xf32>
    %50 = vector.shape_cast %49 : vector<5xf32> to vector<5x1xf32>
    %51 = tpu.reciprocal %50 {approx = true} : vector<5x1xf32> -> vector<5x1xf32>
    %52 = vector.broadcast %51 : vector<5x1xf32> to vector<5x5xf32>
    %53 = arith.mulf %48, %52 : vector<5x5xf32>
    %cst_19 = arith.constant dense<0.000000e+00> : vector<5x8xf32>
    %54 = tpu.matmul %53, %42, %cst_19 {dimension_numbers = #tpu.dot_dimension_numbers<[1], [0], [0], [1], [0, 0, 1, 1], [], []>} : vector<5x5xf32>, vector<5x8xf32>, vector<5x8xf32> -> vector<5x8xf32>
    %c0_20 = arith.constant 0 : index
    %c0_21 = arith.constant 0 : index
    %55 = vector.load %arg15[%c0_20, %c0_21] : memref<16x32xf32, #tpu.memory_space<vmem>>, vector<5x8xf32>
    tpu.vector_store %arg15[%c0_20, %c0_21], %54 {strides = array<i32>} : memref<16x32xf32, #tpu.memory_space<vmem>>, vector<5x8xf32>,
    %56 = vector.extract_strided_slice %39 {offsets = [0, 8], sizes = [5, 8], strides = [1, 1]} : vector<16x96xf32> to vector<5x8xf32>
    %57 = vector.extract_strided_slice %39 {offsets = [0, 40], sizes = [5, 8], strides = [1, 1]} : vector<16x96xf32> to vector<5x8xf32>
    %58 = vector.extract_strided_slice %39 {offsets = [0, 72], sizes = [5, 8], strides = [1, 1]} : vector<16x96xf32> to vector<5x8xf32>
    %cst_22 = arith.constant dense<0.000000e+00> : vector<5x5xf32>
    %59 = tpu.matmul %56, %57, %cst_22 {dimension_numbers = #tpu.dot_dimension_numbers<[1], [1], [0], [0], [0, 0, 1, 0], [], []>} : vector<5x8xf32>, vector<5x8xf32>, vector<5x5xf32> -> vector<5x5xf32>
    %cst_23 = arith.constant dense<0xFF800000> : vector<5xf32>
    %60 = vector.multi_reduction <maximumf>, %59, %cst_23 [1] : vector<5x5xf32> to vector<5xf32>
    %61 = vector.shape_cast %60 : vector<5xf32> to vector<5x1xf32>
    %62 = vector.broadcast %61 : vector<5x1xf32> to vector<5x5xf32>
    %63 = arith.subf %59, %62 : vector<5x5xf32>
    %64 = math.exp %63 : vector<5x5xf32>
    %cst_24 = arith.constant dense<0.000000e+00> : vector<5xf32>
    %65 = vector.multi_reduction <add>, %64, %cst_24 [1] : vector<5x5xf32> to vector<5xf32>
    %66 = vector.shape_cast %65 : vector<5xf32> to vector<5x1xf32>
    %67 = tpu.reciprocal %66 {approx = true} : vector<5x1xf32> -> vector<5x1xf32>
    %68 = vector.broadcast %67 : vector<5x1xf32> to vector<5x5xf32>
    %69 = arith.mulf %64, %68 : vector<5x5xf32>
    %cst_25 = arith.constant dense<0.000000e+00> : vector<5x8xf32>
    %70 = tpu.matmul %69, %58, %cst_25 {dimension_numbers = #tpu.dot_dimension_numbers<[1], [0], [0], [1], [0, 0, 1, 1], [], []>} : vector<5x5xf32>, vector<5x8xf32>, vector<5x8xf32> -> vector<5x8xf32>
    %c0_26 = arith.constant 0 : index
    %c8 = arith.constant 8 : index
    %71 = vector.load %arg15[%c0_26, %c8] : memref<16x32xf32, #tpu.memory_space<vmem>>, vector<5x8xf32>
    tpu.vector_store %arg15[%c0_26, %c8], %70 {strides = array<i32>} : memref<16x32xf32, #tpu.memory_space<vmem>>, vector<5x8xf32>,
    %72 = vector.extract_strided_slice %39 {offsets = [0, 16], sizes = [5, 8], strides = [1, 1]} : vector<16x96xf32> to vector<5x8xf32>
    %73 = vector.extract_strided_slice %39 {offsets = [0, 48], sizes = [5, 8], strides = [1, 1]} : vector<16x96xf32> to vector<5x8xf32>
    %74 = vector.extract_strided_slice %39 {offsets = [0, 80], sizes = [5, 8], strides = [1, 1]} : vector<16x96xf32> to vector<5x8xf32>
    %cst_27 = arith.constant dense<0.000000e+00> : vector<5x5xf32>
    %75 = tpu.matmul %72, %73, %cst_27 {dimension_numbers = #tpu.dot_dimension_numbers<[1], [1], [0], [0], [0, 0, 1, 0], [], []>} : vector<5x8xf32>, vector<5x8xf32>, vector<5x5xf32> -> vector<5x5xf32>
    %cst_28 = arith.constant dense<0xFF800000> : vector<5xf32>
    %76 = vector.multi_reduction <maximumf>, %75, %cst_28 [1] : vector<5x5xf32> to vector<5xf32>
    %77 = vector.shape_cast %76 : vector<5xf32> to vector<5x1xf32>
    %78 = vector.broadcast %77 : vector<5x1xf32> to vector<5x5xf32>
    %79 = arith.subf %75, %78 : vector<5x5xf32>
    %80 = math.exp %79 : vector<5x5xf32>
    %cst_29 = arith.constant dense<0.000000e+00> : vector<5xf32>
    %81 = vector.multi_reduction <add>, %80, %cst_29 [1] : vector<5x5xf32> to vector<5xf32>
    %82 = vector.shape_cast %81 : vector<5xf32> to vector<5x1xf32>
    %83 = tpu.reciprocal %82 {approx = true} : vector<5x1xf32> -> vector<5x1xf32>
    %84 = vector.broadcast %83 : vector<5x1xf32> to vector<5x5xf32>
    %85 = arith.mulf %80, %84 : vector<5x5xf32>
    %cst_30 = arith.constant dense<0.000000e+00> : vector<5x8xf32>
    %86 = tpu.matmul %85, %74, %cst_30 {dimension_numbers = #tpu.dot_dimension_numbers<[1], [0], [0], [1], [0, 0, 1, 1], [], []>} : vector<5x5xf32>, vector<5x8xf32>, vector<5x8xf32> -> vector<5x8xf32>
    %c0_31 = arith.constant 0 : index
    %c16 = arith.constant 16 : index
    %87 = vector.load %arg15[%c0_31, %c16] : memref<16x32xf32, #tpu.memory_space<vmem>>, vector<5x8xf32>
    tpu.vector_store %arg15[%c0_31, %c16], %86 {strides = array<i32>} : memref<16x32xf32, #tpu.memory_space<vmem>>, vector<5x8xf32>,
    %88 = vector.extract_strided_slice %39 {offsets = [0, 24], sizes = [5, 8], strides = [1, 1]} : vector<16x96xf32> to vector<5x8xf32>
    %89 = vector.extract_strided_slice %39 {offsets = [0, 56], sizes = [5, 8], strides = [1, 1]} : vector<16x96xf32> to vector<5x8xf32>
    %90 = vector.extract_strided_slice %39 {offsets = [0, 88], sizes = [5, 8], strides = [1, 1]} : vector<16x96xf32> to vector<5x8xf32>
    %cst_32 = arith.constant dense<0.000000e+00> : vector<5x5xf32>
    %91 = tpu.matmul %88, %89, %cst_32 {dimension_numbers = #tpu.dot_dimension_numbers<[1], [1], [0], [0], [0, 0, 1, 0], [], []>} : vector<5x8xf32>, vector<5x8xf32>, vector<5x5xf32> -> vector<5x5xf32>
    %cst_33 = arith.constant dense<0xFF800000> : vector<5xf32>
    %92 = vector.multi_reduction <maximumf>, %91, %cst_33 [1] : vector<5x5xf32> to vector<5xf32>
    %93 = vector.shape_cast %92 : vector<5xf32> to vector<5x1xf32>
    %94 = vector.broadcast %93 : vector<5x1xf32> to vector<5x5xf32>
    %95 = arith.subf %91, %94 : vector<5x5xf32>
    %96 = math.exp %95 : vector<5x5xf32>
    %cst_34 = arith.constant dense<0.000000e+00> : vector<5xf32>
    %97 = vector.multi_reduction <add>, %96, %cst_34 [1] : vector<5x5xf32> to vector<5xf32>
    %98 = vector.shape_cast %97 : vector<5xf32> to vector<5x1xf32>
    %99 = tpu.reciprocal %98 {approx = true} : vector<5x1xf32> -> vector<5x1xf32>
    %100 = vector.broadcast %99 : vector<5x1xf32> to vector<5x5xf32>
    %101 = arith.mulf %96, %100 : vector<5x5xf32>
    %cst_35 = arith.constant dense<0.000000e+00> : vector<5x8xf32>
    %102 = tpu.matmul %101, %90, %cst_35 {dimension_numbers = #tpu.dot_dimension_numbers<[1], [0], [0], [1], [0, 0, 1, 1], [], []>} : vector<5x5xf32>, vector<5x8xf32>, vector<5x8xf32> -> vector<5x8xf32>
    %c0_36 = arith.constant 0 : index
    %c24 = arith.constant 24 : index
    %103 = vector.load %arg15[%c0_36, %c24] : memref<16x32xf32, #tpu.memory_space<vmem>>, vector<5x8xf32>
    tpu.vector_store %arg15[%c0_36, %c24], %102 {strides = array<i32>} : memref<16x32xf32, #tpu.memory_space<vmem>>, vector<5x8xf32>,
    %104 = vector.extract_strided_slice %39 {offsets = [8, 0], sizes = [5, 8], strides = [1, 1]} : vector<16x96xf32> to vector<5x8xf32>
    %105 = vector.extract_strided_slice %39 {offsets = [8, 32], sizes = [5, 8], strides = [1, 1]} : vector<16x96xf32> to vector<5x8xf32>
    %106 = vector.extract_strided_slice %39 {offsets = [8, 64], sizes = [5, 8], strides = [1, 1]} : vector<16x96xf32> to vector<5x8xf32>
    %cst_37 = arith.constant dense<0.000000e+00> : vector<5x5xf32>
    %107 = tpu.matmul %104, %105, %cst_37 {dimension_numbers = #tpu.dot_dimension_numbers<[1], [1], [0], [0], [0, 0, 1, 0], [], []>} : vector<5x8xf32>, vector<5x8xf32>, vector<5x5xf32> -> vector<5x5xf32>
    %cst_38 = arith.constant dense<0xFF800000> : vector<5xf32>
    %108 = vector.multi_reduction <maximumf>, %107, %cst_38 [1] : vector<5x5xf32> to vector<5xf32>
    %109 = vector.shape_cast %108 : vector<5xf32> to vector<5x1xf32>
    %110 = vector.broadcast %109 : vector<5x1xf32> to vector<5x5xf32>
    %111 = arith.subf %107, %110 : vector<5x5xf32>
    %112 = math.exp %111 : vector<5x5xf32>
    %cst_39 = arith.constant dense<0.000000e+00> : vector<5xf32>
    %113 = vector.multi_reduction <add>, %112, %cst_39 [1] : vector<5x5xf32> to vector<5xf32>
    %114 = vector.shape_cast %113 : vector<5xf32> to vector<5x1xf32>
    %115 = tpu.reciprocal %114 {approx = true} : vector<5x1xf32> -> vector<5x1xf32>
    %116 = vector.broadcast %115 : vector<5x1xf32> to vector<5x5xf32>
    %117 = arith.mulf %112, %116 : vector<5x5xf32>
    %cst_40 = arith.constant dense<0.000000e+00> : vector<5x8xf32>
    %118 = tpu.matmul %117, %106, %cst_40 {dimension_numbers = #tpu.dot_dimension_numbers<[1], [0], [0], [1], [0, 0, 1, 1], [], []>} : vector<5x5xf32>, vector<5x8xf32>, vector<5x8xf32> -> vector<5x8xf32>
    %c8_41 = arith.constant 8 : index
    %c0_42 = arith.constant 0 : index
    %119 = vector.load %arg15[%c8_41, %c0_42] : memref<16x32xf32, #tpu.memory_space<vmem>>, vector<5x8xf32>
    tpu.vector_store %arg15[%c8_41, %c0_42], %118 {strides = array<i32>} : memref<16x32xf32, #tpu.memory_space<vmem>>, vector<5x8xf32>,
    %120 = vector.extract_strided_slice %39 {offsets = [8, 8], sizes = [5, 8], strides = [1, 1]} : vector<16x96xf32> to vector<5x8xf32>
    %121 = vector.extract_strided_slice %39 {offsets = [8, 40], sizes = [5, 8], strides = [1, 1]} : vector<16x96xf32> to vector<5x8xf32>
    %122 = vector.extract_strided_slice %39 {offsets = [8, 72], sizes = [5, 8], strides = [1, 1]} : vector<16x96xf32> to vector<5x8xf32>
    %cst_43 = arith.constant dense<0.000000e+00> : vector<5x5xf32>
    %123 = tpu.matmul %120, %121, %cst_43 {dimension_numbers = #tpu.dot_dimension_numbers<[1], [1], [0], [0], [0, 0, 1, 0], [], []>} : vector<5x8xf32>, vector<5x8xf32>, vector<5x5xf32> -> vector<5x5xf32>
    %cst_44 = arith.constant dense<0xFF800000> : vector<5xf32>
    %124 = vector.multi_reduction <maximumf>, %123, %cst_44 [1] : vector<5x5xf32> to vector<5xf32>
    %125 = vector.shape_cast %124 : vector<5xf32> to vector<5x1xf32>
    %126 = vector.broadcast %125 : vector<5x1xf32> to vector<5x5xf32>
    %127 = arith.subf %123, %126 : vector<5x5xf32>
    %128 = math.exp %127 : vector<5x5xf32>
    %cst_45 = arith.constant dense<0.000000e+00> : vector<5xf32>
    %129 = vector.multi_reduction <add>, %128, %cst_45 [1] : vector<5x5xf32> to vector<5xf32>
    %130 = vector.shape_cast %129 : vector<5xf32> to vector<5x1xf32>
    %131 = tpu.reciprocal %130 {approx = true} : vector<5x1xf32> -> vector<5x1xf32>
    %132 = vector.broadcast %131 : vector<5x1xf32> to vector<5x5xf32>
    %133 = arith.mulf %128, %132 : vector<5x5xf32>
    %cst_46 = arith.constant dense<0.000000e+00> : vector<5x8xf32>
    %134 = tpu.matmul %133, %122, %cst_46 {dimension_numbers = #tpu.dot_dimension_numbers<[1], [0], [0], [1], [0, 0, 1, 1], [], []>} : vector<5x5xf32>, vector<5x8xf32>, vector<5x8xf32> -> vector<5x8xf32>
    %c8_47 = arith.constant 8 : index
    %c8_48 = arith.constant 8 : index
    %135 = vector.load %arg15[%c8_47, %c8_48] : memref<16x32xf32, #tpu.memory_space<vmem>>, vector<5x8xf32>
    tpu.vector_store %arg15[%c8_47, %c8_48], %134 {strides = array<i32>} : memref<16x32xf32, #tpu.memory_space<vmem>>, vector<5x8xf32>,
    %136 = vector.extract_strided_slice %39 {offsets = [8, 16], sizes = [5, 8], strides = [1, 1]} : vector<16x96xf32> to vector<5x8xf32>
    %137 = vector.extract_strided_slice %39 {offsets = [8, 48], sizes = [5, 8], strides = [1, 1]} : vector<16x96xf32> to vector<5x8xf32>
    %138 = vector.extract_strided_slice %39 {offsets = [8, 80], sizes = [5, 8], strides = [1, 1]} : vector<16x96xf32> to vector<5x8xf32>
    %cst_49 = arith.constant dense<0.000000e+00> : vector<5x5xf32>
    %139 = tpu.matmul %136, %137, %cst_49 {dimension_numbers = #tpu.dot_dimension_numbers<[1], [1], [0], [0], [0, 0, 1, 0], [], []>} : vector<5x8xf32>, vector<5x8xf32>, vector<5x5xf32> -> vector<5x5xf32>
    %cst_50 = arith.constant dense<0xFF800000> : vector<5xf32>
    %140 = vector.multi_reduction <maximumf>, %139, %cst_50 [1] : vector<5x5xf32> to vector<5xf32>
    %141 = vector.shape_cast %140 : vector<5xf32> to vector<5x1xf32>
    %142 = vector.broadcast %141 : vector<5x1xf32> to vector<5x5xf32>
    %143 = arith.subf %139, %142 : vector<5x5xf32>
    %144 = math.exp %143 : vector<5x5xf32>
    %cst_51 = arith.constant dense<0.000000e+00> : vector<5xf32>
    %145 = vector.multi_reduction <add>, %144, %cst_51 [1] : vector<5x5xf32> to vector<5xf32>
    %146 = vector.shape_cast %145 : vector<5xf32> to vector<5x1xf32>
    %147 = tpu.reciprocal %146 {approx = true} : vector<5x1xf32> -> vector<5x1xf32>
    %148 = vector.broadcast %147 : vector<5x1xf32> to vector<5x5xf32>
    %149 = arith.mulf %144, %148 : vector<5x5xf32>
    %cst_52 = arith.constant dense<0.000000e+00> : vector<5x8xf32>
    %150 = tpu.matmul %149, %138, %cst_52 {dimension_numbers = #tpu.dot_dimension_numbers<[1], [0], [0], [1], [0, 0, 1, 1], [], []>} : vector<5x5xf32>, vector<5x8xf32>, vector<5x8xf32> -> vector<5x8xf32>
    %c8_53 = arith.constant 8 : index
    %c16_54 = arith.constant 16 : index
    %151 = vector.load %arg15[%c8_53, %c16_54] : memref<16x32xf32, #tpu.memory_space<vmem>>, vector<5x8xf32>
    tpu.vector_store %arg15[%c8_53, %c16_54], %150 {strides = array<i32>} : memref<16x32xf32, #tpu.memory_space<vmem>>, vector<5x8xf32>,
    %152 = vector.extract_strided_slice %39 {offsets = [8, 24], sizes = [5, 8], strides = [1, 1]} : vector<16x96xf32> to vector<5x8xf32>
    %153 = vector.extract_strided_slice %39 {offsets = [8, 56], sizes = [5, 8], strides = [1, 1]} : vector<16x96xf32> to vector<5x8xf32>
    %154 = vector.extract_strided_slice %39 {offsets = [8, 88], sizes = [5, 8], strides = [1, 1]} : vector<16x96xf32> to vector<5x8xf32>
    %cst_55 = arith.constant dense<0.000000e+00> : vector<5x5xf32>
    %155 = tpu.matmul %152, %153, %cst_55 {dimension_numbers = #tpu.dot_dimension_numbers<[1], [1], [0], [0], [0, 0, 1, 0], [], []>} : vector<5x8xf32>, vector<5x8xf32>, vector<5x5xf32> -> vector<5x5xf32>
    %cst_56 = arith.constant dense<0xFF800000> : vector<5xf32>
    %156 = vector.multi_reduction <maximumf>, %155, %cst_56 [1] : vector<5x5xf32> to vector<5xf32>
    %157 = vector.shape_cast %156 : vector<5xf32> to vector<5x1xf32>
    %158 = vector.broadcast %157 : vector<5x1xf32> to vector<5x5xf32>
    %159 = arith.subf %155, %158 : vector<5x5xf32>
    %160 = math.exp %159 : vector<5x5xf32>
    %cst_57 = arith.constant dense<0.000000e+00> : vector<5xf32>
    %161 = vector.multi_reduction <add>, %160, %cst_57 [1] : vector<5x5xf32> to vector<5xf32>
    %162 = vector.shape_cast %161 : vector<5xf32> to vector<5x1xf32>
    %163 = tpu.reciprocal %162 {approx = true} : vector<5x1xf32> -> vector<5x1xf32>
    %164 = vector.broadcast %163 : vector<5x1xf32> to vector<5x5xf32>
    %165 = arith.mulf %160, %164 : vector<5x5xf32>
    %cst_58 = arith.constant dense<0.000000e+00> : vector<5x8xf32>
    %166 = tpu.matmul %165, %154, %cst_58 {dimension_numbers = #tpu.dot_dimension_numbers<[1], [0], [0], [1], [0, 0, 1, 1], [], []>} : vector<5x5xf32>, vector<5x8xf32>, vector<5x8xf32> -> vector<5x8xf32>
    %c8_59 = arith.constant 8 : index
    %c24_60 = arith.constant 24 : index
    %167 = vector.load %arg15[%c8_59, %c24_60] : memref<16x32xf32, #tpu.memory_space<vmem>>, vector<5x8xf32>
    tpu.vector_store %arg15[%c8_59, %c24_60], %166 {strides = array<i32>} : memref<16x32xf32, #tpu.memory_space<vmem>>, vector<5x8xf32>,
    %c0_61 = arith.constant 0 : index
    %c0_62 = arith.constant 0 : index
    %168 = vector.load %arg15[%c0_61, %c0_62] : memref<16x32xf32, #tpu.memory_space<vmem>>, vector<16x32xf32>
    %169 = arith.truncf %168 : vector<16x32xf32> to vector<16x32xbf16>
    %c0_63 = arith.constant 0 : index
    %c0_64 = arith.constant 0 : index
    %c0_65 = arith.constant 0 : index
    %170 = vector.load %arg6[%c0_63, %c0_64, %c0_65] : memref<1x32x32xbf16, #tpu.memory_space<vmem>>, vector<1x32x32xbf16>
    %171 = vector.shape_cast %170 : vector<1x32x32xbf16> to vector<32x32xbf16>
    %cst_66 = arith.constant dense<0.000000e+00> : vector<16x32xf32>
    %172 = tpu.matmul %169, %171, %cst_66 {dimension_numbers = #tpu.dot_dimension_numbers<[1], [0], [0], [1], [0, 0, 1, 1], [], []>} : vector<16x32xbf16>, vector<32x32xbf16>, vector<16x32xf32> -> vector<16x32xf32>
    %173 = vector.broadcast %7 : vector<1x32xf32> to vector<16x32xf32>
    %174 = arith.addf %172, %173 : vector<16x32xf32>
    %175 = arith.addf %11, %174 : vector<16x32xf32>
    %cst_67 = arith.constant dense<0.000000e+00> : vector<16xf32>
    %176 = vector.multi_reduction <add>, %175, %cst_67 [1] : vector<16x32xf32> to vector<16xf32>
    %177 = vector.shape_cast %176 : vector<16xf32> to vector<16x1xf32>
    %cst_68 = arith.constant 3.200000e+01 : f32
    %178 = vector.broadcast %cst_68 : f32 to vector<16x1xf32>
    %179 = arith.divf %177, %178 : vector<16x1xf32>
    %180 = vector.broadcast %179 : vector<16x1xf32> to vector<16x32xf32>
    %181 = arith.subf %175, %180 : vector<16x32xf32>
    %182 = arith.mulf %181, %181 : vector<16x32xf32>
    %cst_69 = arith.constant dense<0.000000e+00> : vector<16xf32>
    %183 = vector.multi_reduction <add>, %182, %cst_69 [1] : vector<16x32xf32> to vector<16xf32>
    %184 = vector.shape_cast %183 : vector<16xf32> to vector<16x1xf32>
    %cst_70 = arith.constant 3.200000e+01 : f32
    %185 = vector.broadcast %cst_70 : f32 to vector<16x1xf32>
    %186 = arith.divf %184, %185 : vector<16x1xf32>
    %cst_71 = arith.constant 9.99999997E-7 : f32
    %187 = vector.broadcast %cst_71 : f32 to vector<16x1xf32>
    %188 = arith.addf %186, %187 : vector<16x1xf32>
    %189 = math.rsqrt %188 : vector<16x1xf32>
    %190 = vector.broadcast %189 : vector<16x1xf32> to vector<16x32xf32>
    %191 = arith.mulf %181, %190 : vector<16x32xf32>
    %192 = vector.broadcast %8 : vector<1x32xf32> to vector<16x32xf32>
    %193 = arith.mulf %191, %192 : vector<16x32xf32>
    %194 = vector.broadcast %9 : vector<1x32xf32> to vector<16x32xf32>
    %195 = arith.addf %193, %194 : vector<16x32xf32>
    %196 = arith.truncf %195 : vector<16x32xf32> to vector<16x32xbf16>
    %c0_72 = arith.constant 0 : index
    %c0_73 = arith.constant 0 : index
    %c0_74 = arith.constant 0 : index
    %197 = vector.load %arg7[%c0_72, %c0_73, %c0_74] : memref<1x32x128xbf16, #tpu.memory_space<vmem>>, vector<1x32x128xbf16>
    %198 = vector.shape_cast %197 : vector<1x32x128xbf16> to vector<32x128xbf16>
    %cst_75 = arith.constant dense<0.000000e+00> : vector<16x128xf32>
    %199 = tpu.matmul %196, %198, %cst_75 {dimension_numbers = #tpu.dot_dimension_numbers<[1], [0], [0], [1], [0, 0, 1, 1], [], []>} : vector<16x32xbf16>, vector<32x128xbf16>, vector<16x128xf32> -> vector<16x128xf32>
    %c0_76 = arith.constant 0 : index
    %c0_77 = arith.constant 0 : index
    %c0_78 = arith.constant 0 : index
    %200 = vector.load %arg8[%c0_76, %c0_77, %c0_78] : memref<1x1x128xf32, #tpu.memory_space<vmem>>, vector<1x1x128xf32>
    %201 = vector.shape_cast %200 : vector<1x1x128xf32> to vector<1x128xf32>
    %202 = vector.broadcast %201 : vector<1x128xf32> to vector<16x128xf32>
    %203 = arith.addf %199, %202 : vector<16x128xf32>
    %204 = arith.mulf %203, %203 : vector<16x128xf32>
    %205 = arith.mulf %203, %204 : vector<16x128xf32>
    %cst_79 = arith.constant 4.471500e-02 : f32
    %206 = vector.broadcast %cst_79 : f32 to vector<16x128xf32>
    %207 = arith.mulf %206, %205 : vector<16x128xf32>
    %208 = arith.addf %203, %207 : vector<16x128xf32>
    %cst_80 = arith.constant 0.797884583 : f32
    %209 = vector.broadcast %cst_80 : f32 to vector<16x128xf32>
    %210 = arith.mulf %209, %208 : vector<16x128xf32>
    %211 = math.tanh %210 : vector<16x128xf32>
    %cst_81 = arith.constant 1.000000e+00 : f32
    %212 = vector.broadcast %cst_81 : f32 to vector<16x128xf32>
    %213 = arith.addf %212, %211 : vector<16x128xf32>
    %cst_82 = arith.constant 5.000000e-01 : f32
    %214 = vector.broadcast %cst_82 : f32 to vector<16x128xf32>
    %215 = arith.mulf %214, %213 : vector<16x128xf32>
    %216 = arith.mulf %203, %215 : vector<16x128xf32>
    %217 = arith.truncf %216 : vector<16x128xf32> to vector<16x128xbf16>
    %c0_83 = arith.constant 0 : index
    %c0_84 = arith.constant 0 : index
    %c0_85 = arith.constant 0 : index
    %218 = vector.load %arg9[%c0_83, %c0_84, %c0_85] : memref<1x128x32xbf16, #tpu.memory_space<vmem>>, vector<1x128x32xbf16>
    %219 = vector.shape_cast %218 : vector<1x128x32xbf16> to vector<128x32xbf16>
    %cst_86 = arith.constant dense<0.000000e+00> : vector<16x32xf32>
    %220 = tpu.matmul %217, %219, %cst_86 {dimension_numbers = #tpu.dot_dimension_numbers<[1], [0], [0], [1], [0, 0, 1, 1], [], []>} : vector<16x128xbf16>, vector<128x32xbf16>, vector<16x32xf32> -> vector<16x32xf32>
    %221 = vector.broadcast %10 : vector<1x32xf32> to vector<16x32xf32>
    %222 = arith.addf %220, %221 : vector<16x32xf32>
    %223 = arith.addf %175, %222 : vector<16x32xf32>
    %c0_87 = arith.constant 0 : index
    %c0_88 = arith.constant 0 : index
    %224 = vector.load %arg14[%c0_87, %c0_88] : memref<16x32xf32, #tpu.memory_space<vmem>>, vector<16x32xf32>
    tpu.vector_store %arg14[%c0_87, %c0_88], %223 {strides = array<i32>} : memref<16x32xf32, #tpu.memory_space<vmem>>, vector<16x32xf32>,
    %c1_i32 = arith.constant 1 : i32
    %225 = arith.cmpi eq, %arg1, %c1_i32 : i32
    %226 = arith.extui %225 : i1 to i32
    %c0_i32_89 = arith.constant 0 : i32
    %227 = arith.cmpi ne, %226, %c0_i32_89 : i32
    scf.if %227 {
      %c0_90 = arith.constant 0 : index
      %c0_91 = arith.constant 0 : index
      %228 = vector.load %arg10[%c0_90, %c0_91] : memref<2x32xf32, #tpu.memory_space<vmem>>, vector<2x32xf32>
      %229 = vector.extract_strided_slice %223 {offsets = [0, 0], sizes = [1, 32], strides = [1, 1]} : vector<16x32xf32> to vector<1x32xf32>
      %230 = vector.extract_strided_slice %228 {offsets = [0, 0], sizes = [1, 32], strides = [1, 1]} : vector<2x32xf32> to vector<1x32xf32>
      %231 = vector.extract_strided_slice %228 {offsets = [1, 0], sizes = [1, 32], strides = [1, 1]} : vector<2x32xf32> to vector<1x32xf32>
      %cst_92 = arith.constant dense<0.000000e+00> : vector<1xf32>
      %232 = vector.multi_reduction <add>, %229, %cst_92 [1] : vector<1x32xf32> to vector<1xf32>
      %233 = vector.shape_cast %232 : vector<1xf32> to vector<1x1xf32>
      %cst_93 = arith.constant 3.200000e+01 : f32
      %234 = vector.broadcast %cst_93 : f32 to vector<1x1xf32>
      %235 = arith.divf %233, %234 : vector<1x1xf32>
      %236 = vector.broadcast %235 : vector<1x1xf32> to vector<1x32xf32>
      %237 = arith.subf %229, %236 : vector<1x32xf32>
      %238 = arith.mulf %237, %237 : vector<1x32xf32>
      %cst_94 = arith.constant dense<0.000000e+00> : vector<1xf32>
      %239 = vector.multi_reduction <add>, %238, %cst_94 [1] : vector<1x32xf32> to vector<1xf32>
      %240 = vector.shape_cast %239 : vector<1xf32> to vector<1x1xf32>
      %cst_95 = arith.constant 3.200000e+01 : f32
      %241 = vector.broadcast %cst_95 : f32 to vector<1x1xf32>
      %242 = arith.divf %240, %241 : vector<1x1xf32>
      %cst_96 = arith.constant 9.99999997E-7 : f32
      %243 = vector.broadcast %cst_96 : f32 to vector<1x1xf32>
      %244 = arith.addf %242, %243 : vector<1x1xf32>
      %245 = math.rsqrt %244 : vector<1x1xf32>
      %246 = vector.broadcast %245 : vector<1x1xf32> to vector<1x32xf32>
      %247 = arith.mulf %237, %246 : vector<1x32xf32>
      %248 = arith.mulf %247, %230 : vector<1x32xf32>
      %249 = arith.addf %248, %231 : vector<1x32xf32>
      %250 = arith.truncf %249 : vector<1x32xf32> to vector<1x32xbf16>
      %c0_97 = arith.constant 0 : index
      %c0_98 = arith.constant 0 : index
      %251 = vector.load %arg11[%c0_97, %c0_98] : memref<32x128xbf16, #tpu.memory_space<vmem>>, vector<32x128xbf16>
      %cst_99 = arith.constant dense<0.000000e+00> : vector<1x128xf32>
      %252 = tpu.matmul %250, %251, %cst_99 {dimension_numbers = #tpu.dot_dimension_numbers<[1], [0], [0], [1], [0, 0, 1, 1], [], []>} : vector<1x32xbf16>, vector<32x128xbf16>, vector<1x128xf32> -> vector<1x128xf32>
      %c0_100 = arith.constant 0 : index
      %c0_101 = arith.constant 0 : index
      %253 = vector.load %arg12[%c0_100, %c0_101] : memref<1x128xf32, #tpu.memory_space<vmem>>, vector<1x128xf32>
      %254 = arith.addf %252, %253 : vector<1x128xf32>
      %c0_102 = arith.constant 0 : index
      %c0_103 = arith.constant 0 : index
      %c0_104 = arith.constant 0 : index
      %255 = vector.load %arg13[%c0_102, %c0_103, %c0_104] : memref<1x2x128xf32, #tpu.memory_space<vmem>>, vector<1x1x128xf32>
      %256 = vector.shape_cast %255 : vector<1x1x128xf32> to vector<1x128xf32>
      %257 = vector.shape_cast %254 : vector<1x128xf32> to vector<1x1x128xf32>
      tpu.vector_store %arg13[%c0_102, %c0_103, %c0_104], %257 {strides = array<i32>} : memref<1x2x128xf32, #tpu.memory_space<vmem>>, vector<1x1x128xf32>,
      %258 = vector.extract_strided_slice %223 {offsets = [8, 0], sizes = [1, 32], strides = [1, 1]} : vector<16x32xf32> to vector<1x32xf32>
      %259 = vector.extract_strided_slice %228 {offsets = [0, 0], sizes = [1, 32], strides = [1, 1]} : vector<2x32xf32> to vector<1x32xf32>
      %260 = vector.extract_strided_slice %228 {offsets = [1, 0], sizes = [1, 32], strides = [1, 1]} : vector<2x32xf32> to vector<1x32xf32>
      %cst_105 = arith.constant dense<0.000000e+00> : vector<1xf32>
      %261 = vector.multi_reduction <add>, %258, %cst_105 [1] : vector<1x32xf32> to vector<1xf32>
      %262 = vector.shape_cast %261 : vector<1xf32> to vector<1x1xf32>
      %cst_106 = arith.constant 3.200000e+01 : f32
      %263 = vector.broadcast %cst_106 : f32 to vector<1x1xf32>
      %264 = arith.divf %262, %263 : vector<1x1xf32>
      %265 = vector.broadcast %264 : vector<1x1xf32> to vector<1x32xf32>
      %266 = arith.subf %258, %265 : vector<1x32xf32>
      %267 = arith.mulf %266, %266 : vector<1x32xf32>
      %cst_107 = arith.constant dense<0.000000e+00> : vector<1xf32>
      %268 = vector.multi_reduction <add>, %267, %cst_107 [1] : vector<1x32xf32> to vector<1xf32>
      %269 = vector.shape_cast %268 : vector<1xf32> to vector<1x1xf32>
      %cst_108 = arith.constant 3.200000e+01 : f32
      %270 = vector.broadcast %cst_108 : f32 to vector<1x1xf32>
      %271 = arith.divf %269, %270 : vector<1x1xf32>
      %cst_109 = arith.constant 9.99999997E-7 : f32
      %272 = vector.broadcast %cst_109 : f32 to vector<1x1xf32>
      %273 = arith.addf %271, %272 : vector<1x1xf32>
      %274 = math.rsqrt %273 : vector<1x1xf32>
      %275 = vector.broadcast %274 : vector<1x1xf32> to vector<1x32xf32>
      %276 = arith.mulf %266, %275 : vector<1x32xf32>
      %277 = arith.mulf %276, %259 : vector<1x32xf32>
      %278 = arith.addf %277, %260 : vector<1x32xf32>
      %279 = arith.truncf %278 : vector<1x32xf32> to vector<1x32xbf16>
      %c0_110 = arith.constant 0 : index
      %c0_111 = arith.constant 0 : index
      %280 = vector.load %arg11[%c0_110, %c0_111] : memref<32x128xbf16, #tpu.memory_space<vmem>>, vector<32x128xbf16>
      %cst_112 = arith.constant dense<0.000000e+00> : vector<1x128xf32>
      %281 = tpu.matmul %279, %280, %cst_112 {dimension_numbers = #tpu.dot_dimension_numbers<[1], [0], [0], [1], [0, 0, 1, 1], [], []>} : vector<1x32xbf16>, vector<32x128xbf16>, vector<1x128xf32> -> vector<1x128xf32>
      %c0_113 = arith.constant 0 : index
      %c0_114 = arith.constant 0 : index
      %282 = vector.load %arg12[%c0_113, %c0_114] : memref<1x128xf32, #tpu.memory_space<vmem>>, vector<1x128xf32>
      %283 = arith.addf %281, %282 : vector<1x128xf32>
      %c0_115 = arith.constant 0 : index
      %c1 = arith.constant 1 : index
      %c0_116 = arith.constant 0 : index
      %284 = vector.load %arg13[%c0_115, %c1, %c0_116] : memref<1x2x128xf32, #tpu.memory_space<vmem>>, vector<1x1x128xf32>
      %285 = vector.shape_cast %284 : vector<1x1x128xf32> to vector<1x128xf32>
      %286 = vector.shape_cast %283 : vector<1x128xf32> to vector<1x1x128xf32>
      tpu.vector_store %arg13[%c0_115, %c1, %c0_116], %286 {strides = array<i32>} : memref<1x2x128xf32, #tpu.memory_space<vmem>>, vector<1x1x128xf32>,
    } else {
    }
    return
  }
  func.func @transform_0(%arg0: i32, %arg1: i32) -> (i32, i32) {
    %c0_i32 = arith.constant 0 : i32
    %c0_i32_0 = arith.constant 0 : i32
    return %arg0, %c0_i32 : i32, i32
  }
  func.func @transform_1(%arg0: i32, %arg1: i32) -> (i32, i32, i32) {
    %c0_i32 = arith.constant 0 : i32
    %c0_i32_0 = arith.constant 0 : i32
    %c0_i32_1 = arith.constant 0 : i32
    return %arg1, %c0_i32, %c0_i32_0 : i32, i32, i32
  }
  func.func @transform_2(%arg0: i32, %arg1: i32) -> (i32, i32, i32) {
    %c0_i32 = arith.constant 0 : i32
    %c0_i32_0 = arith.constant 0 : i32
    %c0_i32_1 = arith.constant 0 : i32
    return %arg1, %c0_i32, %c0_i32_0 : i32, i32, i32
  }
  func.func @transform_3(%arg0: i32, %arg1: i32) -> (i32, i32, i32) {
    %c0_i32 = arith.constant 0 : i32
    %c0_i32_0 = arith.constant 0 : i32
    %c0_i32_1 = arith.constant 0 : i32
    return %arg1, %c0_i32, %c0_i32_0 : i32, i32, i32
  }
  func.func @transform_4(%arg0: i32, %arg1: i32) -> (i32, i32, i32) {
    %c0_i32 = arith.constant 0 : i32
    %c0_i32_0 = arith.constant 0 : i32
    %c0_i32_1 = arith.constant 0 : i32
    return %arg1, %c0_i32, %c0_i32_0 : i32, i32, i32
  }
  func.func @transform_5(%arg0: i32, %arg1: i32) -> (i32, i32, i32) {
    %c0_i32 = arith.constant 0 : i32
    %c0_i32_0 = arith.constant 0 : i32
    %c0_i32_1 = arith.constant 0 : i32
    return %arg1, %c0_i32, %c0_i32_0 : i32, i32, i32
  }
  func.func @transform_6(%arg0: i32, %arg1: i32) -> (i32, i32, i32) {
    %c0_i32 = arith.constant 0 : i32
    %c0_i32_0 = arith.constant 0 : i32
    %c0_i32_1 = arith.constant 0 : i32
    return %arg1, %c0_i32, %c0_i32_0 : i32, i32, i32
  }
  func.func @transform_7(%arg0: i32, %arg1: i32) -> (i32, i32, i32) {
    %c0_i32 = arith.constant 0 : i32
    %c0_i32_0 = arith.constant 0 : i32
    %c0_i32_1 = arith.constant 0 : i32
    return %arg1, %c0_i32, %c0_i32_0 : i32, i32, i32
  }
  func.func @transform_8(%arg0: i32, %arg1: i32) -> (i32, i32) {
    %c0_i32 = arith.constant 0 : i32
    %c0_i32_0 = arith.constant 0 : i32
    %c0_i32_1 = arith.constant 0 : i32
    return %c0_i32, %c0_i32_0 : i32, i32
  }
  func.func @transform_9(%arg0: i32, %arg1: i32) -> (i32, i32) {
    %c0_i32 = arith.constant 0 : i32
    %c0_i32_0 = arith.constant 0 : i32
    %c0_i32_1 = arith.constant 0 : i32
    return %c0_i32, %c0_i32_0 : i32, i32
  }
  func.func @transform_10(%arg0: i32, %arg1: i32) -> (i32, i32) {
    %c0_i32 = arith.constant 0 : i32
    %c0_i32_0 = arith.constant 0 : i32
    %c0_i32_1 = arith.constant 0 : i32
    return %c0_i32, %c0_i32_0 : i32, i32
  }
  func.func @transform_11(%arg0: i32, %arg1: i32) -> (i32, i32, i32) {
    %c0_i32 = arith.constant 0 : i32
    %c0_i32_0 = arith.constant 0 : i32
    %c0_i32_1 = arith.constant 0 : i32
    return %arg0, %c0_i32, %c0_i32_0 : i32, i32, i32
  }
}

</mosaic_0001>

<llo_original>
// kernel: tile.11
$region0: #{tile.11}
  #allocation0 [shape = 's32[1]{0}', space=sflag, size = 0x4, scoped, tag = 'scoped memory for tile.11']
  %s0 = inlined_call_operand.vmem [shape: f32[3], index: 0, kind: input, shape index: {}]
  %s1 = inlined_call_operand.vmem [shape: f32[64,3], index: 1, kind: output, shape index: {}]
  // Predicated region
  $region2: #{tile.11} parent=0 // pred_check
    _
  $region3: #{tile.11} parent=0 // pred_check_branch
    %3 = sbr.rel (0) target = $region5
  $region4: #{tile.11} parent=0 // pred_region
    _
  $region5: #{tile.11} parent=0 // pred_fallthru
    _
  %v4 = vld [vmem:[%s0] ss:$0 sm:$0xff]
  %5 = vst [vmem:[%s1] sm:$0xff] %v4
  %s6 = scalar_lea.vmem %s1, 8
  %7 = vst [vmem:[%s6] sm:$0xff] %v4
  %s8 = scalar_lea.vmem %s1, 16
  %9 = vst [vmem:[%s8] sm:$0xff] %v4
  %s10 = scalar_lea.vmem %s1, 24
  %11 = vst [vmem:[%s10] sm:$0xff] %v4
  %s12 = scalar_lea.vmem %s1, 32
  %13 = vst [vmem:[%s12] sm:$0xff] %v4
  %s14 = scalar_lea.vmem %s1, 40
  %15 = vst [vmem:[%s14] sm:$0xff] %v4
  %s16 = scalar_lea.vmem %s1, 48
  %17 = vst [vmem:[%s16] sm:$0xff] %v4
  %s18 = scalar_lea.vmem %s1, 56
  %19 = vst [vmem:[%s18] sm:$0xff] %v4

// kernel: mul.38
$region0: #{mul.38}
  %s0 = inlined_call_operand.vmem [shape: f32[64,3], index: 0, kind: input, shape index: {}]
  %s1 = inlined_call_operand.vmem [shape: f32[192], index: 1, kind: output, shape index: {}]
  $region1: #{mul.38} parent=0
    #allocation0 [shape = 'u8[4096]{0}', space=vmem, size = 0x1000, scoped, tag = 'scoped mem for output reshape']
    %v2 = vld [vmem:[%s0] sm:$0x1]
    %vm3 = vcmask 23552
    %4 = vst.msk [vmem:[#allocation0] sm:$0x1] %vm3, %v2
    %s5 = scalar_lea.vmem %s0, 42
    %v6 = vld [vmem:[%s5] sm:$0x1]
    %s7 = scalar_lea.vmem %s0, 42
    %v8 = vld [vmem:[%s7] sm:$0x1]
    %vm9 = vcmask 15360
    %v10 = vsel %vm9, %v8, %v6
    %11 = vrot.lane.b32.xlu0 %v10, 126
    %v12 = vpop.permute.xlu0 %11
    %vm13 = vcmask 7168
    %s14 = scalar_lea.vmem [#allocation0], 1
    %15 = vst.msk [vmem:[%s14] sm:$0x1] %vm13, %v12
    %vm16 = vcmask 1048560
    %17 = vst.msk [vmem:[#allocation0] sm:$0x1] %vm16, %v12
    %s18 = scalar_lea.vmem %s0, 41
    %v19 = vld [vmem:[%s18] sm:$0x1]
    %20 = vrot.lane.b32.xlu0 %v19, 123
    %v21 = vpop.permute.xlu0 %20
    %vm22 = vcmask 1032152
    %23 = vst.msk [vmem:[#allocation0] sm:$0x1] %vm22, %v21
    %s24 = scalar_lea.vmem %s0, 40
    %v25 = vld [vmem:[%s24] sm:$0x1]
    %26 = vrot.lane.b32.xlu0 %v25, 120
    %v27 = vpop.permute.xlu0 %26
    %vm28 = vcmask 1007552
    %29 = vst.msk [vmem:[#allocation0] sm:$0x1] %vm28, %v27
    %s30 = scalar_lea.vmem %s0, 39
    %v31 = vld [vmem:[%s30] sm:$0x1]
    %32 = vrot.lane.b32.xlu0 %v31, 117
    %v33 = vpop.permute.xlu0 %32
    %vm34 = vcmask 982952
    %35 = vst.msk [vmem:[#allocation0] sm:$0x1] %vm34, %v33
    %s36 = scalar_lea.vmem %s0, 38
    %v37 = vld [vmem:[%s36] sm:$0x1]
    %38 = vrot.lane.b32.xlu0 %v37, 114
    %v39 = vpop.permute.xlu0 %38
    %vm40 = vcmask 958352
    %41 = vst.msk [vmem:[#allocation0] sm:$0x1] %vm40, %v39
    %s42 = scalar_lea.vmem %s0, 37
    %v43 = vld [vmem:[%s42] sm:$0x1]
    %44 = vrot.lane.b32.xlu0 %v43, 111
    %v45 = vpop.permute.xlu0 %44
    %vm46 = vcmask 933752
    %47 = vst.msk [vmem:[#allocation0] sm:$0x1] %vm46, %v45
    %s48 = scalar_lea.vmem %s0, 36
    %v49 = vld [vmem:[%s48] sm:$0x1]
    %50 = vrot.lane.b32.xlu0 %v49, 108
    %v51 = vpop.permute.xlu0 %50
    %vm52 = vcmask 909152
    %53 = vst.msk [vmem:[#allocation0] sm:$0x1] %vm52, %v51
    %s54 = scalar_lea.vmem %s0, 35
    %v55 = vld [vmem:[%s54] sm:$0x1]
    %56 = vrot.lane.b32.xlu0 %v55, 105
    %v57 = vpop.permute.xlu0 %56
    %vm58 = vcmask 884552
    %59 = vst.msk [vmem:[#allocation0] sm:$0x1] %vm58, %v57
    %s60 = scalar_lea.vmem %s0, 34
    %v61 = vld [vmem:[%s60] sm:$0x1]
    %62 = vrot.lane.b32.xlu0 %v61, 102
    %v63 = vpop.permute.xlu0 %62
    %vm64 = vcmask 859952
    %65 = vst.msk [vmem:[#allocation0] sm:$0x1] %vm64, %v63
    %s66 = scalar_lea.vmem %s0, 33
    %v67 = vld [vmem:[%s66] sm:$0x1]
    %68 = vrot.lane.b32.xlu0 %v67, 99
    %v69 = vpop.permute.xlu0 %68
    %vm70 = vcmask 835352
    %71 = vst.msk [vmem:[#allocation0] sm:$0x1] %vm70, %v69
    %s72 = scalar_lea.vmem %s0, 32
    %v73 = vld [vmem:[%s72] sm:$0x1]
    %74 = vrot.lane.b32.xlu0 %v73, 96
    %v75 = vpop.permute.xlu0 %74
    %vm76 = vcmask 810752
    %77 = vst.msk [vmem:[#allocation0] sm:$0x1] %vm76, %v75
    %s78 = scalar_lea.vmem %s0, 31
    %v79 = vld [vmem:[%s78] sm:$0x1]
    %80 = vrot.lane.b32.xlu0 %v79, 93
    %v81 = vpop.permute.xlu0 %80
    %vm82 = vcmask 786152
    %83 = vst.msk [vmem:[#allocation0] sm:$0x1] %vm82, %v81
    %s84 = scalar_lea.vmem %s0, 30
    %v85 = vld [vmem:[%s84] sm:$0x1]
    %86 = vrot.lane.b32.xlu0 %v85, 90
    %v87 = vpop.permute.xlu0 %86
    %vm88 = vcmask 761552
    %89 = vst.msk [vmem:[#allocation0] sm:$0x1] %vm88, %v87
    %s90 = scalar_lea.vmem %s0, 29
    %v91 = vld [vmem:[%s90] sm:$0x1]
    %92 = vrot.lane.b32.xlu0 %v91, 87
    %v93 = vpop.permute.xlu0 %92
    %vm94 = vcmask 736952
    %95 = vst.msk [vmem:[#allocation0] sm:$0x1] %vm94, %v93
    %s96 = scalar_lea.vmem %s0, 28
    %v97 = vld [vmem:[%s96] sm:$0x1]
    %98 = vrot.lane.b32.xlu0 %v97, 84
    %v99 = vpop.permute.xlu0 %98
    %vm100 = vcmask 712352
    %101 = vst.msk [vmem:[#allocation0] sm:$0x1] %vm100, %v99
    %s102 = scalar_lea.vmem %s0, 27
    %v103 = vld [vmem:[%s102] sm:$0x1]
    %104 = vrot.lane.b32.xlu0 %v103, 81
    %v105 = vpop.permute.xlu0 %104
    %vm106 = vcmask 687752
    %107 = vst.msk [vmem:[#allocation0] sm:$0x1] %vm106, %v105
    %s108 = scalar_lea.vmem %s0, 26
    %v109 = vld [vmem:[%s108] sm:$0x1]
    %110 = vrot.lane.b32.xlu0 %v109, 78
    %v111 = vpop.permute.xlu0 %110
    %vm112 = vcmask 663152
    %113 = vst.msk [vmem:[#allocation0] sm:$0x1] %vm112, %v111
    %s114 = scalar_lea.vmem %s0, 25
    %v115 = vld [vmem:[%s114] sm:$0x1]
    %116 = vrot.lane.b32.xlu0 %v115, 75
    %v117 = vpop.permute.xlu0 %116
    %vm118 = vcmask 638552
    %119 = vst.msk [vmem:[#allocation0] sm:$0x1] %vm118, %v117
    %s120 = scalar_lea.vmem %s0, 24
    %v121 = vld [vmem:[%s120] sm:$0x1]
    %122 = vrot.lane.b32.xlu0 %v121, 72
    %v123 = vpop.permute.xlu0 %122
    %vm124 = vcmask 613952
    %125 = vst.msk [vmem:[#allocation0] sm:$0x1] %vm124, %v123
    %s126 = scalar_lea.vmem %s0, 23
    %v127 = vld [vmem:[%s126] sm:$0x1]
    %128 = vrot.lane.b32.xlu0 %v127, 69
    %v129 = vpop.permute.xlu0 %128
    %vm130 = vcmask 589352
    %131 = vst.msk [vmem:[#allocation0] sm:$0x1] %vm130, %v129
    %s132 = scalar_lea.vmem %s0, 22
    %v133 = vld [vmem:[%s132] sm:$0x1]
    %134 = vrot.lane.b32.xlu0 %v133, 66
    %v135 = vpop.permute.xlu0 %134
    %vm136 = vcmask 564752
    %137 = vst.msk [vmem:[#allocation0] sm:$0x1] %vm136, %v135
    %s138 = scalar_lea.vmem %s0, 21
    %v139 = vld [vmem:[%s138] sm:$0x1]
    %140 = vrot.lane.b32.xlu0 %v139, 63
    %v141 = vpop.permute.xlu0 %140
    %vm142 = vcmask 540152
    %143 = vst.msk [vmem:[#allocation0] sm:$0x1] %vm142, %v141
    %s144 = scalar_lea.vmem %s0, 63
    %v145 = vld [vmem:[%s144] sm:$0x1]
    %146 = vrot.lane.b32.xlu0 %v145, 61
    %v147 = vpop.permute.xlu0 %146
    %vm148 = vcmask 523752
    %s149 = scalar_lea.vmem [#allocation0], 1
    %150 = vst.msk [vmem:[%s149] sm:$0x1] %vm148, %v147
    %s151 = scalar_lea.vmem %s0, 20
    %v152 = vld [vmem:[%s151] sm:$0x1]
    %153 = vrot.lane.b32.xlu0 %v152, 60
    %v154 = vpop.permute.xlu0 %153
    %vm155 = vcmask 515552
    %156 = vst.msk [vmem:[#allocation0] sm:$0x1] %vm155, %v154
    %s157 = scalar_lea.vmem %s0, 62
    %v158 = vld [vmem:[%s157] sm:$0x1]
    %159 = vrot.lane.b32.xlu0 %v158, 58
    %v160 = vpop.permute.xlu0 %159
    %vm161 = vcmask 499152
    %s162 = scalar_lea.vmem [#allocation0], 1
    %163 = vst.msk [vmem:[%s162] sm:$0x1] %vm161, %v160
    %s164 = scalar_lea.vmem %s0, 19
    %v165 = vld [vmem:[%s164] sm:$0x1]
    %166 = vrot.lane.b32.xlu0 %v165, 57
    %v167 = vpop.permute.xlu0 %166
    %vm168 = vcmask 490952
    %169 = vst.msk [vmem:[#allocation0] sm:$0x1] %vm168, %v167
    %s170 = scalar_lea.vmem %s0, 61
    %v171 = vld [vmem:[%s170] sm:$0x1]
    %172 = vrot.lane.b32.xlu0 %v171, 55
    %v173 = vpop.permute.xlu0 %172
    %vm174 = vcmask 474552
    %s175 = scalar_lea.vmem [#allocation0], 1
    %176 = vst.msk [vmem:[%s175] sm:$0x1] %vm174, %v173
    %s177 = scalar_lea.vmem %s0, 18
    %v178 = vld [vmem:[%s177] sm:$0x1]
    %179 = vrot.lane.b32.xlu0 %v178, 54
    %v180 = vpop.permute.xlu0 %179
    %vm181 = vcmask 466352
    %182 = vst.msk [vmem:[#allocation0] sm:$0x1] %vm181, %v180
    %s183 = scalar_lea.vmem %s0, 60
    %v184 = vld [vmem:[%s183] sm:$0x1]
    %185 = vrot.lane.b32.xlu0 %v184, 52
    %v186 = vpop.permute.xlu0 %185
    %vm187 = vcmask 449952
    %s188 = scalar_lea.vmem [#allocation0], 1
    %189 = vst.msk [vmem:[%s188] sm:$0x1] %vm187, %v186
    %s190 = scalar_lea.vmem %s0, 17
    %v191 = vld [vmem:[%s190] sm:$0x1]
    %192 = vrot.lane.b32.xlu0 %v191, 51
    %v193 = vpop.permute.xlu0 %192
    %vm194 = vcmask 441752
    %195 = vst.msk [vmem:[#allocation0] sm:$0x1] %vm194, %v193
    %s196 = scalar_lea.vmem %s0, 59
    %v197 = vld [vmem:[%s196] sm:$0x1]
    %198 = vrot.lane.b32.xlu0 %v197, 49
    %v199 = vpop.permute.xlu0 %198
    %vm200 = vcmask 425352
    %s201 = scalar_lea.vmem [#allocation0], 1
    %202 = vst.msk [vmem:[%s201] sm:$0x1] %vm200, %v199
    %s203 = scalar_lea.vmem %s0, 16
    %v204 = vld [vmem:[%s203] sm:$0x1]
    %205 = vrot.lane.b32.xlu0 %v204, 48
    %v206 = vpop.permute.xlu0 %205
    %vm207 = vcmask 417152
    %208 = vst.msk [vmem:[#allocation0] sm:$0x1] %vm207, %v206
    %s209 = scalar_lea.vmem %s0, 58
    %v210 = vld [vmem:[%s209] sm:$0x1]
    %211 = vrot.lane.b32.xlu0 %v210, 46
    %v212 = vpop.permute.xlu0 %211
    %vm213 = vcmask 400752
    %s214 = scalar_lea.vmem [#allocation0], 1
    %215 = vst.msk [vmem:[%s214] sm:$0x1] %vm213, %v212
    %s216 = scalar_lea.vmem %s0, 15
    %v217 = vld [vmem:[%s216] sm:$0x1]
    %218 = vrot.lane.b32.xlu0 %v217, 45
    %v219 = vpop.permute.xlu0 %218
    %vm220 = vcmask 392552
    %221 = vst.msk [vmem:[#allocation0] sm:$0x1] %vm220, %v219
    %s222 = scalar_lea.vmem %s0, 57
    %v223 = vld [vmem:[%s222] sm:$0x1]
    %224 = vrot.lane.b32.xlu0 %v223, 43
    %v225 = vpop.permute.xlu0 %224
    %vm226 = vcmask 376152
    %s227 = scalar_lea.vmem [#allocation0], 1
    %228 = vst.msk [vmem:[%s227] sm:$0x1] %vm226, %v225
    %s229 = scalar_lea.vmem %s0, 14
    %v230 = vld [vmem:[%s229] sm:$0x1]
    %231 = vrot.lane.b32.xlu0 %v230, 42
    %v232 = vpop.permute.xlu0 %231
    %vm233 = vcmask 367952
    %234 = vst.msk [vmem:[#allocation0] sm:$0x1] %vm233, %v232
    %s235 = scalar_lea.vmem %s0, 56
    %v236 = vld [vmem:[%s235] sm:$0x1]
    %237 = vrot.lane.b32.xlu0 %v236, 40
    %v238 = vpop.permute.xlu0 %237
    %vm239 = vcmask 351552
    %s240 = scalar_lea.vmem [#allocation0], 1
    %241 = vst.msk [vmem:[%s240] sm:$0x1] %vm239, %v238
    %s242 = scalar_lea.vmem %s0, 13
    %v243 = vld [vmem:[%s242] sm:$0x1]
    %244 = vrot.lane.b32.xlu0 %v243, 39
    %v245 = vpop.permute.xlu0 %244
    %vm246 = vcmask 343352
    %247 = vst.msk [vmem:[#allocation0] sm:$0x1] %vm246, %v245
    %s248 = scalar_lea.vmem %s0, 55
    %v249 = vld [vmem:[%s248] sm:$0x1]
    %250 = vrot.lane.b32.xlu0 %v249, 37
    %v251 = vpop.permute.xlu0 %250
    %vm252 = vcmask 326952
    %s253 = scalar_lea.vmem [#allocation0], 1
    %254 = vst.msk [vmem:[%s253] sm:$0x1] %vm252, %v251
    %s255 = scalar_lea.vmem %s0, 12
    %v256 = vld [vmem:[%s255] sm:$0x1]
    %257 = vrot.lane.b32.xlu0 %v256, 36
    %v258 = vpop.permute.xlu0 %257
    %vm259 = vcmask 318752
    %260 = vst.msk [vmem:[#allocation0] sm:$0x1] %vm259, %v258
    %s261 = scalar_lea.vmem %s0, 54
    %v262 = vld [vmem:[%s261] sm:$0x1]
    %263 = vrot.lane.b32.xlu0 %v262, 34
    %v264 = vpop.permute.xlu0 %263
    %vm265 = vcmask 302352
    %s266 = scalar_lea.vmem [#allocation0], 1
    %267 = vst.msk [vmem:[%s266] sm:$0x1] %vm265, %v264
    %s268 = scalar_lea.vmem %s0, 11
    %v269 = vld [vmem:[%s268] sm:$0x1]
    %270 = vrot.lane.b32.xlu0 %v269, 33
    %v271 = vpop.permute.xlu0 %270
    %vm272 = vcmask 294152
    %273 = vst.msk [vmem:[#allocation0] sm:$0x1] %vm272, %v271
    %s274 = scalar_lea.vmem %s0, 53
    %v275 = vld [vmem:[%s274] sm:$0x1]
    %276 = vrot.lane.b32.xlu0 %v275, 31
    %v277 = vpop.permute.xlu0 %276
    %vm278 = vcmask 277752
    %s279 = scalar_lea.vmem [#allocation0], 1
    %280 = vst.msk [vmem:[%s279] sm:$0x1] %vm278, %v277
    %s281 = scalar_lea.vmem %s0, 10
    %v282 = vld [vmem:[%s281] sm:$0x1]
    %283 = vrot.lane.b32.xlu0 %v282, 30
    %v284 = vpop.permute.xlu0 %283
    %vm285 = vcmask 269552
    %286 = vst.msk [vmem:[#allocation0] sm:$0x1] %vm285, %v284
    %s287 = scalar_lea.vmem %s0, 52
    %v288 = vld [vmem:[%s287] sm:$0x1]
    %289 = vrot.lane.b32.xlu0 %v288, 28
    %v290 = vpop.permute.xlu0 %289
    %vm291 = vcmask 253152
    %s292 = scalar_lea.vmem [#allocation0], 1
    %293 = vst.msk [vmem:[%s292] sm:$0x1] %vm291, %v290
    %s294 = scalar_lea.vmem %s0, 9
    %v295 = vld [vmem:[%s294] sm:$0x1]
    %296 = vrot.lane.b32.xlu0 %v295, 27
    %v297 = vpop.permute.xlu0 %296
    %vm298 = vcmask 244952
    %299 = vst.msk [vmem:[#allocation0] sm:$0x1] %vm298, %v297
    %s300 = scalar_lea.vmem %s0, 51
    %v301 = vld [vmem:[%s300] sm:$0x1]
    %302 = vrot.lane.b32.xlu0 %v301, 25
    %v303 = vpop.permute.xlu0 %302
    %vm304 = vcmask 228552
    %s305 = scalar_lea.vmem [#allocation0], 1
    %306 = vst.msk [vmem:[%s305] sm:$0x1] %vm304, %v303
    %s307 = scalar_lea.vmem %s0, 8
    %v308 = vld [vmem:[%s307] sm:$0x1]
    %309 = vrot.lane.b32.xlu0 %v308, 24
    %v310 = vpop.permute.xlu0 %309
    %vm311 = vcmask 220352
    %312 = vst.msk [vmem:[#allocation0] sm:$0x1] %vm311, %v310
    %s313 = scalar_lea.vmem %s0, 50
    %v314 = vld [vmem:[%s313] sm:$0x1]
    %315 = vrot.lane.b32.xlu0 %v314, 22
    %v316 = vpop.permute.xlu0 %315
    %vm317 = vcmask 203952
    %s318 = scalar_lea.vmem [#allocation0], 1
    %319 = vst.msk [vmem:[%s318] sm:$0x1] %vm317, %v316
    %s320 = scalar_lea.vmem %s0, 7
    %v321 = vld [vmem:[%s320] sm:$0x1]
    %322 = vrot.lane.b32.xlu0 %v321, 21
    %v323 = vpop.permute.xlu0 %322
    %vm324 = vcmask 195752
    %325 = vst.msk [vmem:[#allocation0] sm:$0x1] %vm324, %v323
    %s326 = scalar_lea.vmem %s0, 49
    %v327 = vld [vmem:[%s326] sm:$0x1]
    %328 = vrot.lane.b32.xlu0 %v327, 19
    %v329 = vpop.permute.xlu0 %328
    %vm330 = vcmask 179352
    %s331 = scalar_lea.vmem [#allocation0], 1
    %332 = vst.msk [vmem:[%s331] sm:$0x1] %vm330, %v329
    %s333 = scalar_lea.vmem %s0, 6
    %v334 = vld [vmem:[%s333] sm:$0x1]
    %335 = vrot.lane.b32.xlu0 %v334, 18
    %v336 = vpop.permute.xlu0 %335
    %vm337 = vcmask 171152
    %338 = vst.msk [vmem:[#allocation0] sm:$0x1] %vm337, %v336
    %s339 = scalar_lea.vmem %s0, 48
    %v340 = vld [vmem:[%s339] sm:$0x1]
    %341 = vrot.lane.b32.xlu0 %v340, 16
    %v342 = vpop.permute.xlu0 %341
    %vm343 = vcmask 154752
    %s344 = scalar_lea.vmem [#allocation0], 1
    %345 = vst.msk [vmem:[%s344] sm:$0x1] %vm343, %v342
    %s346 = scalar_lea.vmem %s0, 5
    %v347 = vld [vmem:[%s346] sm:$0x1]
    %348 = vrot.lane.b32.xlu0 %v347, 15
    %v349 = vpop.permute.xlu0 %348
    %vm350 = vcmask 146552
    %351 = vst.msk [vmem:[#allocation0] sm:$0x1] %vm350, %v349
    %s352 = scalar_lea.vmem %s0, 47
    %v353 = vld [vmem:[%s352] sm:$0x1]
    %354 = vrot.lane.b32.xlu0 %v353, 13
    %v355 = vpop.permute.xlu0 %354
    %vm356 = vcmask 130152
    %s357 = scalar_lea.vmem [#allocation0], 1
    %358 = vst.msk [vmem:[%s357] sm:$0x1] %vm356, %v355
    %s359 = scalar_lea.vmem %s0, 4
    %v360 = vld [vmem:[%s359] sm:$0x1]
    %361 = vrot.lane.b32.xlu0 %v360, 12
    %v362 = vpop.permute.xlu0 %361
    %vm363 = vcmask 121952
    %364 = vst.msk [vmem:[#allocation0] sm:$0x1] %vm363, %v362
    %s365 = scalar_lea.vmem %s0, 46
    %v366 = vld [vmem:[%s365] sm:$0x1]
    %367 = vrot.lane.b32.xlu0 %v366, 10
    %v368 = vpop.permute.xlu0 %367
    %vm369 = vcmask 105552
    %s370 = scalar_lea.vmem [#allocation0], 1
    %371 = vst.msk [vmem:[%s370] sm:$0x1] %vm369, %v368
    %s372 = scalar_lea.vmem %s0, 3
    %v373 = vld [vmem:[%s372] sm:$0x1]
    %374 = vrot.lane.b32.xlu0 %v373, 9
    %v375 = vpop.permute.xlu0 %374
    %vm376 = vcmask 97352
    %377 = vst.msk [vmem:[#allocation0] sm:$0x1] %vm376, %v375
    %s378 = scalar_lea.vmem %s0, 45
    %v379 = vld [vmem:[%s378] sm:$0x1]
    %380 = vrot.lane.b32.xlu0 %v379, 7
    %v381 = vpop.permute.xlu0 %380
    %vm382 = vcmask 80952
    %s383 = scalar_lea.vmem [#allocation0], 1
    %384 = vst.msk [vmem:[%s383] sm:$0x1] %vm382, %v381
    %s385 = scalar_lea.vmem %s0, 2
    %v386 = vld [vmem:[%s385] sm:$0x1]
    %387 = vrot.lane.b32.xlu0 %v386, 6
    %v388 = vpop.permute.xlu0 %387
    %vm389 = vcmask 72752
    %390 = vst.msk [vmem:[#allocation0] sm:$0x1] %vm389, %v388
    %s391 = scalar_lea.vmem %s0, 44
    %v392 = vld [vmem:[%s391] sm:$0x1]
    %393 = vrot.lane.b32.xlu0 %v392, 4
    %v394 = vpop.permute.xlu0 %393
    %vm395 = vcmask 56352
    %s396 = scalar_lea.vmem [#allocation0], 1
    %397 = vst.msk [vmem:[%s396] sm:$0x1] %vm395, %v394
    %s398 = scalar_lea.vmem %s0, 1
    %v399 = vld [vmem:[%s398] sm:$0x1]
    %400 = vrot.lane.b32.xlu0 %v399, 3
    %v401 = vpop.permute.xlu0 %400
    %vm402 = vcmask 48152
    %403 = vst.msk [vmem:[#allocation0] sm:$0x1] %vm402, %v401
    %s404 = scalar_lea.vmem %s0, 43
    %v405 = vld [vmem:[%s404] sm:$0x1]
    %406 = vrot.lane.b32.xlu0 %v405, 1
    %v407 = vpop.permute.xlu0 %406
    %vm408 = vcmask 31752
    %s409 = scalar_lea.vmem [#allocation0], 1
    %410 = vst.msk [vmem:[%s409] sm:$0x1] %vm408, %v407
    %s412 = ssub.s32 4, 1
    %v413 = vld [vmem:[#allocation0] sm:%s412]
    %s415 = ssub.s32 4, 1
    %416 = vst [vmem:[%s1] sm:%s415] %v413

// kernel: mul.41
$region0: #{mul.41}
  #allocation0 [shape = 's32[1]{0}', space=sflag, size = 0x4, scoped, tag = 'scoped memory for mul.41']
  %s0 = inlined_call_operand.vmem [shape: f32[192], index: 0, kind: input, shape index: {}]
  %s1 = inlined_call_operand.vmem [shape: f32[192], index: 1, kind: input, shape index: {}]
  %s2 = inlined_call_operand.vmem [shape: f32[192], index: 2, kind: output, shape index: {}]
  %v3 = vld [vmem:[%s0] sm:$0x3]
  %v4 = vld [vmem:[%s1] sm:$0x3]
  %5 = xla_tuple %v3, %v4
  %6 = xla_tuple %5
  %v7 = vmul.f32 %v3, %v4
  %8 = xla_tuple %v7
  %9 = vst [vmem:[%s2] sm:$0x3] %v7

// kernel: sub.37
$region0: #{sub.37}
  #allocation0 [shape = 's32[1]{0}', space=sflag, size = 0x4, scoped, tag = 'scoped memory for sub.37']
  %s0 = inlined_call_operand.vmem [shape: f32[32], index: 0, kind: input, shape index: {}]
  %s1 = inlined_call_operand.vmem [shape: f32[32], index: 1, kind: input, shape index: {}]
  %s2 = inlined_call_operand.vmem [shape: f32[32], index: 2, kind: output, shape index: {}]
  %v3 = vld [vmem:[%s0] sm:$0x1]
  %v4 = vld [vmem:[%s1] sm:$0x1]
  %5 = xla_tuple %v3, %v4
  %6 = xla_tuple %5
  %v7 = vsub.f32 %v3, %v4
  %8 = xla_tuple %v7
  %9 = vst [vmem:[%s2] sm:$0x1] %v7

// kernel: dinov2_encoder_forward.1
$region0: #{dinov2_encoder_forward.1}
  #allocation0 [shape = 'u32[]', space=smem, size = 0x4, offset = 0x4, fixed_abs, tag = 'smem constant byte address 0x4 - core index']
  #allocation1 [shape = 'u32[72,128]{1,0:T(1,128)}', space=vmem, size = 0x9000, scoped, tag = 'internal scratch']
  #allocation2 [shape = 'f32[16,32]{1,0:T(8,128)}', space=vmem, size = 0x2000, scoped, tag = 'scratch operand']
  #allocation3 [shape = 'f32[16,32]{1,0:T(8,128)}', space=vmem, size = 0x2000, scoped, tag = 'scratch operand']
  %s0 = inlined_call_operand.vmem [shape: f32[32,32], index: 0, kind: input, shape index: {}]
  %s1 = inlined_call_operand.vmem [shape: f32[2,6,32], index: 1, kind: input, shape index: {}]
  %s2 = inlined_call_operand.vmem [shape: bf16[2,32,96], index: 2, kind: input, shape index: {}]
  %s3 = inlined_call_operand.vmem [shape: f32[2,1,96], index: 3, kind: input, shape index: {}]
  %s4 = inlined_call_operand.vmem [shape: bf16[2,32,32], index: 4, kind: input, shape index: {}]
  %s5 = inlined_call_operand.vmem [shape: bf16[2,32,128], index: 5, kind: input, shape index: {}]
  %s6 = inlined_call_operand.vmem [shape: f32[2,1,128], index: 6, kind: input, shape index: {}]
  %s7 = inlined_call_operand.vmem [shape: bf16[2,128,32], index: 7, kind: input, shape index: {}]
  %s8 = inlined_call_operand.vmem [shape: f32[2,32], index: 8, kind: input, shape index: {}]
  %s9 = inlined_call_operand.vmem [shape: bf16[32,128], index: 9, kind: input, shape index: {}]
  %s10 = inlined_call_operand.vmem [shape: f32[1,128], index: 10, kind: input, shape index: {}]
  %s11 = inlined_call_operand.hbm [shape: f32[2,2,128], index: 11, kind: output, shape index: {}]
  %s12 = sld [smem:[#allocation0]]
  $region85: #{dinov2_encoder_forward.1} parent=0
    _
  %s14 = ssub.s32 1, %s12
  %s15 = scalar_select 0, %s14, %s12
  $region1: #{dinov2_encoder_forward.1} parent=0
    #allocation4 [shape = 'u8[2048]{0}', space=vmem, size = 0x800, scoped, tag = 'output window, operand 0']
    #allocation5 [shape = 's32[2]{0}', space=sflag, size = 0x8, scoped, tag = 'scoped memory for dinov2_encoder_forward.1']
    %16 = vsyncpa [#allocation5], 0
    %s17 = scalar_lea.sflag [#allocation5], 1
    %18 = vsyncpa %s17, 0
    loop: start=0, step=1, limit=6
    $region2: #{dinov2_encoder_forward.1} parent=1 // loop_pre_header
      _
    $region3: #{dinov2_encoder_forward.1} parent=1 // loop_header
      %s20 = sphi 0, %s24
      %p21 = scmp.ge.s32.totalorder %s20, 6
      %s27 = sphi 0, %s39
      %s28 = sphi 0, %s35
      %s29 = sphi 0, %s27
      %s30 = sphi 0, %s28
      %s31 = sphi 0, %s29
      %s32 = sphi 0, %s30
      %s42 = sphi 0, %s44
      %s45 = sphi 0, %s42
      %s46 = sphi 0, %s45
      %s62 = sphi 0, %s46
      %s68 = sphi 0, %s70
      %s71 = sphi 0, %s68
      %s72 = sphi 0, %s71
      %s88 = sphi 0, %s72
      %s94 = sphi 0, %s96
      %s97 = sphi 0, %s94
      %s98 = sphi 0, %s97
      %s114 = sphi 0, %s98
      %s120 = sphi 0, %s122
      %s123 = sphi 0, %s120
      %s124 = sphi 0, %s123
      %s140 = sphi 0, %s124
      %s146 = sphi 0, %s148
      %s149 = sphi 0, %s146
      %s150 = sphi 0, %s149
      %s166 = sphi 0, %s150
      %s172 = sphi 0, %s174
      %s175 = sphi 0, %s172
      %s176 = sphi 0, %s175
      %s192 = sphi 0, %s176
      %s198 = sphi 0, %s200
      %s201 = sphi 0, %s198
      %s202 = sphi 0, %s201
      %s218 = sphi 0, %s202
      %s224 = sphi 0, %s226
      %s227 = sphi 0, %s224
      %s228 = sphi 0, %s227
      %s244 = sphi 0, %s228
      %s248 = sphi 0, %s248
      %s250 = sphi 0, %s248
      %s251 = sphi 0, %s250
      %s265 = sphi 0, %s251
      %s269 = sphi 0, %s269
      %s271 = sphi 0, %s269
      %s272 = sphi 0, %s271
      %s286 = sphi 0, %s272
      %s290 = sphi 0, %s290
      %s292 = sphi 0, %s290
      %s293 = sphi 0, %s292
      %s307 = sphi 0, %s293
      %s313 = sphi 0, %s315
      %s316 = sphi 0, %s313
      %s317 = sphi 0, %s316
      %s333 = sphi 0, %s317
    $region4: #{dinov2_encoder_forward.1} parent=1 // loop_header_branch
      %23 = sbr.rel (%p21) target = $region8
    $region5: #{dinov2_encoder_forward.1} parent=1 // loop_body
      %s25 = ssub.s32 %s20, 1
      %s26 = ssub.s32 %s20, 2
      %s33 = sadd.s32 1, %s28
      %p34 = scmp.ge.s32.totalorder %s33, 2
      %s35 = scalar_select %p34, 0, %s33
      %s36 = sadd.s32 1, %s27
      %s37 = scalar_select %p34, %s36, %s27
      %p38 = scmp.ge.s32.totalorder %s37, 2
      %s39 = scalar_select %p38, 0, %s37
      %s40 = ssub.s32 %s27, %s39
      %p41 = scmp.eq.s32.totalorder %s40, 0
      %s43 = sadd.s32 %s42, 1
      %s44 = scalar_select %p41, %s42, %s43
      %p47 = pneg %p41
      %p48 = scmp.eq.s32.totalorder %s20, 3
      %p49 = por %p47, %p48
      %p50 = scmp.ne.s32.totalorder %s42, %s45
      %p51 = scmp.eq.s32.totalorder %s20, 0
      %p52 = por %p50, %p51
      %p53 = scmp.ne.s32.totalorder %s42, %s45
      %p54 = scmp.eq.s32.totalorder %s25, 3
      %p55 = por %p53, %p54
      %p56 = scmp.ne.s32.totalorder %s45, %s46
      %p57 = scmp.eq.s32.totalorder %s25, 0
      %p58 = por %p56, %p57
      %p59 = scmp.ne.s32.totalorder %s45, %s46
      %p60 = scmp.eq.s32.totalorder %s26, 3
      %p61 = por %p59, %p60
      %p63 = scmp.ne.s32.totalorder %s46, %s62
      %p64 = scmp.eq.s32.totalorder %s26, 0
      %p65 = por %p63, %p64
      %s66 = ssub.s32 %s28, %s35
      %p67 = scmp.eq.s32.totalorder %s66, 0
      %s69 = sadd.s32 %s68, 1
      %s70 = scalar_select %p67, %s68, %s69
      %p73 = pneg %p67
      %p74 = scmp.eq.s32.totalorder %s20, 3
      %p75 = por %p73, %p74
      %p76 = scmp.ne.s32.totalorder %s68, %s71
      %p77 = scmp.eq.s32.totalorder %s20, 0
      %p78 = por %p76, %p77
      %p79 = scmp.ne.s32.totalorder %s68, %s71
      %p80 = scmp.eq.s32.totalorder %s25, 3
      %p81 = por %p79, %p80
      %p82 = scmp.ne.s32.totalorder %s71, %s72
      %p83 = scmp.eq.s32.totalorder %s25, 0
      %p84 = por %p82, %p83
      %p85 = scmp.ne.s32.totalorder %s71, %s72
      %p86 = scmp.eq.s32.totalorder %s26, 3
      %p87 = por %p85, %p86
      %p89 = scmp.ne.s32.totalorder %s72, %s88
      %p90 = scmp.eq.s32.totalorder %s26, 0
      %p91 = por %p89, %p90
      %s92 = ssub.s32 %s28, %s35
      %p93 = scmp.eq.s32.totalorder %s92, 0
      %s95 = sadd.s32 %s94, 1
      %s96 = scalar_select %p93, %s94, %s95
      %p99 = pneg %p93
      %p100 = scmp.eq.s32.totalorder %s20, 3
      %p101 = por %p99, %p100
      %p102 = scmp.ne.s32.totalorder %s94, %s97
      %p103 = scmp.eq.s32.totalorder %s20, 0
      %p104 = por %p102, %p103
      %p105 = scmp.ne.s32.totalorder %s94, %s97
      %p106 = scmp.eq.s32.totalorder %s25, 3
      %p107 = por %p105, %p106
      %p108 = scmp.ne.s32.totalorder %s97, %s98
      %p109 = scmp.eq.s32.totalorder %s25, 0
      %p110 = por %p108, %p109
      %p111 = scmp.ne.s32.totalorder %s97, %s98
      %p112 = scmp.eq.s32.totalorder %s26, 3
      %p113 = por %p111, %p112
      %p115 = scmp.ne.s32.totalorder %s98, %s114
      %p116 = scmp.eq.s32.totalorder %s26, 0
      %p117 = por %p115, %p116
      %s118 = ssub.s32 %s28, %s35
      %p119 = scmp.eq.s32.totalorder %s118, 0
      %s121 = sadd.s32 %s120, 1
      %s122 = scalar_select %p119, %s120, %s121
      %p125 = pneg %p119
      %p126 = scmp.eq.s32.totalorder %s20, 3
      %p127 = por %p125, %p126
      %p128 = scmp.ne.s32.totalorder %s120, %s123
      %p129 = scmp.eq.s32.totalorder %s20, 0
      %p130 = por %p128, %p129
      %p131 = scmp.ne.s32.totalorder %s120, %s123
      %p132 = scmp.eq.s32.totalorder %s25, 3
      %p133 = por %p131, %p132
      %p134 = scmp.ne.s32.totalorder %s123, %s124
      %p135 = scmp.eq.s32.totalorder %s25, 0
      %p136 = por %p134, %p135
      %p137 = scmp.ne.s32.totalorder %s123, %s124
      %p138 = scmp.eq.s32.totalorder %s26, 3
      %p139 = por %p137, %p138
      %p141 = scmp.ne.s32.totalorder %s124, %s140
      %p142 = scmp.eq.s32.totalorder %s26, 0
      %p143 = por %p141, %p142
      %s144 = ssub.s32 %s28, %s35
      %p145 = scmp.eq.s32.totalorder %s144, 0
      %s147 = sadd.s32 %s146, 1
      %s148 = scalar_select %p145, %s146, %s147
      %p151 = pneg %p145
      %p152 = scmp.eq.s32.totalorder %s20, 3
      %p153 = por %p151, %p152
      %p154 = scmp.ne.s32.totalorder %s146, %s149
      %p155 = scmp.eq.s32.totalorder %s20, 0
      %p156 = por %p154, %p155
      %p157 = scmp.ne.s32.totalorder %s146, %s149
      %p158 = scmp.eq.s32.totalorder %s25, 3
      %p159 = por %p157, %p158
      %p160 = scmp.ne.s32.totalorder %s149, %s150
      %p161 = scmp.eq.s32.totalorder %s25, 0
      %p162 = por %p160, %p161
      %p163 = scmp.ne.s32.totalorder %s149, %s150
      %p164 = scmp.eq.s32.totalorder %s26, 3
      %p165 = por %p163, %p164
      %p167 = scmp.ne.s32.totalorder %s150, %s166
      %p168 = scmp.eq.s32.totalorder %s26, 0
      %p169 = por %p167, %p168
      %s170 = ssub.s32 %s28, %s35
      %p171 = scmp.eq.s32.totalorder %s170, 0
      %s173 = sadd.s32 %s172, 1
      %s174 = scalar_select %p171, %s172, %s173
      %p177 = pneg %p171
      %p178 = scmp.eq.s32.totalorder %s20, 3
      %p179 = por %p177, %p178
      %p180 = scmp.ne.s32.totalorder %s172, %s175
      %p181 = scmp.eq.s32.totalorder %s20, 0
      %p182 = por %p180, %p181
      %p183 = scmp.ne.s32.totalorder %s172, %s175
      %p184 = scmp.eq.s32.totalorder %s25, 3
      %p185 = por %p183, %p184
      %p186 = scmp.ne.s32.totalorder %s175, %s176
      %p187 = scmp.eq.s32.totalorder %s25, 0
      %p188 = por %p186, %p187
      %p189 = scmp.ne.s32.totalorder %s175, %s176
      %p190 = scmp.eq.s32.totalorder %s26, 3
      %p191 = por %p189, %p190
      %p193 = scmp.ne.s32.totalorder %s176, %s192
      %p194 = scmp.eq.s32.totalorder %s26, 0
      %p195 = por %p193, %p194
      %s196 = ssub.s32 %s28, %s35
      %p197 = scmp.eq.s32.totalorder %s196, 0
      %s199 = sadd.s32 %s198, 1
      %s200 = scalar_select %p197, %s198, %s199
      %p203 = pneg %p197
      %p204 = scmp.eq.s32.totalorder %s20, 3
      %p205 = por %p203, %p204
      %p206 = scmp.ne.s32.totalorder %s198, %s201
      %p207 = scmp.eq.s32.totalorder %s20, 0
      %p208 = por %p206, %p207
      %p209 = scmp.ne.s32.totalorder %s198, %s201
      %p210 = scmp.eq.s32.totalorder %s25, 3
      %p211 = por %p209, %p210
      %p212 = scmp.ne.s32.totalorder %s201, %s202
      %p213 = scmp.eq.s32.totalorder %s25, 0
      %p214 = por %p212, %p213
      %p215 = scmp.ne.s32.totalorder %s201, %s202
      %p216 = scmp.eq.s32.totalorder %s26, 3
      %p217 = por %p215, %p216
      %p219 = scmp.ne.s32.totalorder %s202, %s218
      %p220 = scmp.eq.s32.totalorder %s26, 0
      %p221 = por %p219, %p220
      %s222 = ssub.s32 %s28, %s35
      %p223 = scmp.eq.s32.totalorder %s222, 0
      %s225 = sadd.s32 %s224, 1
      %s226 = scalar_select %p223, %s224, %s225
      %p229 = pneg %p223
      %p230 = scmp.eq.s32.totalorder %s20, 3
      %p231 = por %p229, %p230
      %p232 = scmp.ne.s32.totalorder %s224, %s227
      %p233 = scmp.eq.s32.totalorder %s20, 0
      %p234 = por %p232, %p233
      %p235 = scmp.ne.s32.totalorder %s224, %s227
      %p236 = scmp.eq.s32.totalorder %s25, 3
      %p237 = por %p235, %p236
      %p238 = scmp.ne.s32.totalorder %s227, %s228
      %p239 = scmp.eq.s32.totalorder %s25, 0
      %p240 = por %p238, %p239
      %p241 = scmp.ne.s32.totalorder %s227, %s228
      %p242 = scmp.eq.s32.totalorder %s26, 3
      %p243 = por %p241, %p242
      %p245 = scmp.ne.s32.totalorder %s228, %s244
      %p246 = scmp.eq.s32.totalorder %s26, 0
      %p247 = por %p245, %p246
      %s249 = sadd.s32 %s248, 1
      %p252 = scmp.eq.s32.totalorder %s20, 3
      %p253 = scmp.ne.s32.totalorder %s248, %s250
      %p254 = scmp.eq.s32.totalorder %s20, 0
      %p255 = por %p253, %p254
      %p256 = scmp.ne.s32.totalorder %s248, %s250
      %p257 = scmp.eq.s32.totalorder %s25, 3
      %p258 = por %p256, %p257
      %p259 = scmp.ne.s32.totalorder %s250, %s251
      %p260 = scmp.eq.s32.totalorder %s25, 0
      %p261 = por %p259, %p260
      %p262 = scmp.ne.s32.totalorder %s250, %s251
      %p263 = scmp.eq.s32.totalorder %s26, 3
      %p264 = por %p262, %p263
      %p266 = scmp.ne.s32.totalorder %s251, %s265
      %p267 = scmp.eq.s32.totalorder %s26, 0
      %p268 = por %p266, %p267
      %s270 = sadd.s32 %s269, 1
      %p273 = scmp.eq.s32.totalorder %s20, 3
      %p274 = scmp.ne.s32.totalorder %s269, %s271
      %p275 = scmp.eq.s32.totalorder %s20, 0
      %p276 = por %p274, %p275
      %p277 = scmp.ne.s32.totalorder %s269, %s271
      %p278 = scmp.eq.s32.totalorder %s25, 3
      %p279 = por %p277, %p278
      %p280 = scmp.ne.s32.totalorder %s271, %s272
      %p281 = scmp.eq.s32.totalorder %s25, 0
      %p282 = por %p280, %p281
      %p283 = scmp.ne.s32.totalorder %s271, %s272
      %p284 = scmp.eq.s32.totalorder %s26, 3
      %p285 = por %p283, %p284
      %p287 = scmp.ne.s32.totalorder %s272, %s286
      %p288 = scmp.eq.s32.totalorder %s26, 0
      %p289 = por %p287, %p288
      %s291 = sadd.s32 %s290, 1
      %p294 = scmp.eq.s32.totalorder %s20, 3
      %p295 = scmp.ne.s32.totalorder %s290, %s292
      %p296 = scmp.eq.s32.totalorder %s20, 0
      %p297 = por %p295, %p296
      %p298 = scmp.ne.s32.totalorder %s290, %s292
      %p299 = scmp.eq.s32.totalorder %s25, 3
      %p300 = por %p298, %p299
      %p301 = scmp.ne.s32.totalorder %s292, %s293
      %p302 = scmp.eq.s32.totalorder %s25, 0
      %p303 = por %p301, %p302
      %p304 = scmp.ne.s32.totalorder %s292, %s293
      %p305 = scmp.eq.s32.totalorder %s26, 3
      %p306 = por %p304, %p305
      %p308 = scmp.ne.s32.totalorder %s293, %s307
      %p309 = scmp.eq.s32.totalorder %s26, 0
      %p310 = por %p308, %p309
      %s311 = ssub.s32 %s27, %s39
      %p312 = scmp.eq.s32.totalorder %s311, 0
      %s314 = sadd.s32 %s313, 1
      %s315 = scalar_select %p312, %s313, %s314
      %p318 = pneg %p312
      %p319 = scmp.eq.s32.totalorder %s20, 3
      %p320 = por %p318, %p319
      %p321 = scmp.ne.s32.totalorder %s313, %s316
      %p322 = scmp.eq.s32.totalorder %s20, 0
      %p323 = por %p321, %p322
      %p324 = scmp.ne.s32.totalorder %s313, %s316
      %p325 = scmp.eq.s32.totalorder %s25, 3
      %p326 = por %p324, %p325
      %p327 = scmp.ne.s32.totalorder %s316, %s317
      %p328 = scmp.eq.s32.totalorder %s25, 0
      %p329 = por %p327, %p328
      %p330 = scmp.ne.s32.totalorder %s316, %s317
      %p331 = scmp.eq.s32.totalorder %s26, 3
      %p332 = por %p330, %p331
      %p334 = scmp.ne.s32.totalorder %s317, %s333
      %p335 = scmp.eq.s32.totalorder %s26, 0
      %p336 = por %p334, %p335
      %p337 = scmp.le.s32.totalorder 1, %s20
      %p338 = scmp.lt.s32.totalorder %s20, 5
      %p339 = pnand %p337, %p338
      %p340 = pneg %p339
      // Predicated region
      $region9: #{dinov2_encoder_forward.1} parent=5 // pred_check
        _
      $region10: #{dinov2_encoder_forward.1} parent=5 // pred_check_branch
        %342 = sbr.rel (%p339) target = $region12
      $region11: #{dinov2_encoder_forward.1} parent=5 // pred_region
        %s343 = ssub.s32 %s20, 1
        // Predicated region
        $region13: #{dinov2_encoder_forward.1} parent=11 // pred_check
          %p344 = pneg %p261
        $region14: #{dinov2_encoder_forward.1} parent=11 // pred_check_branch
          %346 = sbr.rel (%p344) target = $region16
        $region15: #{dinov2_encoder_forward.1} parent=11 // pred_region
          _
        $region16: #{dinov2_encoder_forward.1} parent=11 // pred_fallthru
          _
        // Predicated region
        $region17: #{dinov2_encoder_forward.1} parent=11 // pred_check
          %p347 = pneg %p282
        $region18: #{dinov2_encoder_forward.1} parent=11 // pred_check_branch
          %349 = sbr.rel (%p347) target = $region20
        $region19: #{dinov2_encoder_forward.1} parent=11 // pred_region
          _
        $region20: #{dinov2_encoder_forward.1} parent=11 // pred_fallthru
          _
        // Predicated region
        $region21: #{dinov2_encoder_forward.1} parent=11 // pred_check
          %p350 = pneg %p303
        $region22: #{dinov2_encoder_forward.1} parent=11 // pred_check_branch
          %352 = sbr.rel (%p350) target = $region24
        $region23: #{dinov2_encoder_forward.1} parent=11 // pred_region
          _
        $region24: #{dinov2_encoder_forward.1} parent=11 // pred_fallthru
          _
      $region12: #{dinov2_encoder_forward.1} parent=5 // pred_fallthru
        _
      %p353 = scmp.lt.s32.totalorder %s20, 4
      // Predicated region
      $region25: #{dinov2_encoder_forward.1} parent=5 // pred_check
        %p354 = pneg %p353
      $region26: #{dinov2_encoder_forward.1} parent=5 // pred_check_branch
        %356 = sbr.rel (%p354) target = $region28
      $region27: #{dinov2_encoder_forward.1} parent=5 // pred_region
        // Predicated region
        $region29: #{dinov2_encoder_forward.1} parent=27 // pred_check
          %p357 = pneg %p52
        $region30: #{dinov2_encoder_forward.1} parent=27 // pred_check_branch
          %359 = sbr.rel (%p357) target = $region32
        $region31: #{dinov2_encoder_forward.1} parent=27 // pred_region
          %s360 = smul.u32 2, %s27
          %p361 = scmp.lt.s32.totalorder %s360, 3
          %s362 = scalar_select %p361, %s360, 3
          %s363 = smul.addr %s362, 8
          %s364 = scalar_lea.vmem %s0, %s363
          %s365 = smul.u32 2, %s27
        $region32: #{dinov2_encoder_forward.1} parent=27 // pred_fallthru
          _
        // Predicated region
        $region33: #{dinov2_encoder_forward.1} parent=27 // pred_check
          %p366 = pneg %p78
        $region34: #{dinov2_encoder_forward.1} parent=27 // pred_check_branch
          %368 = sbr.rel (%p366) target = $region36
        $region35: #{dinov2_encoder_forward.1} parent=27 // pred_region
          %p369 = scmp.lt.s32.totalorder %s28, 1
          %s370 = scalar_select %p369, %s28, 1
          %s371 = smul.addr %s370, 8
          %s372 = scalar_lea.vmem %s1, %s371
        $region36: #{dinov2_encoder_forward.1} parent=27 // pred_fallthru
          _
        // Predicated region
        $region37: #{dinov2_encoder_forward.1} parent=27 // pred_check
          %p373 = pneg %p104
        $region38: #{dinov2_encoder_forward.1} parent=27 // pred_check_branch
          %375 = sbr.rel (%p373) target = $region40
        $region39: #{dinov2_encoder_forward.1} parent=27 // pred_region
          %p376 = scmp.lt.s32.totalorder %s28, 1
          %s377 = scalar_select %p376, %s28, 1
          %s378 = smul.addr %s377, 4
          %s379 = smul.addr %s378, 4
          %s380 = scalar_lea.vmem %s2, %s379
        $region40: #{dinov2_encoder_forward.1} parent=27 // pred_fallthru
          _
        // Predicated region
        $region41: #{dinov2_encoder_forward.1} parent=27 // pred_check
          %p381 = pneg %p130
        $region42: #{dinov2_encoder_forward.1} parent=27 // pred_check_branch
          %383 = sbr.rel (%p381) target = $region44
        $region43: #{dinov2_encoder_forward.1} parent=27 // pred_region
          %p384 = scmp.lt.s32.totalorder %s28, 1
          %s385 = scalar_select %p384, %s28, 1
          %s386 = scalar_lea.vmem %s3, %s385
        $region44: #{dinov2_encoder_forward.1} parent=27 // pred_fallthru
          _
        // Predicated region
        $region45: #{dinov2_encoder_forward.1} parent=27 // pred_check
          %p387 = pneg %p156
        $region46: #{dinov2_encoder_forward.1} parent=27 // pred_check_branch
          %389 = sbr.rel (%p387) target = $region48
        $region47: #{dinov2_encoder_forward.1} parent=27 // pred_region
          %p390 = scmp.lt.s32.totalorder %s28, 1
          %s391 = scalar_select %p390, %s28, 1
          %s392 = smul.addr %s391, 4
          %s393 = smul.addr %s392, 4
          %s394 = scalar_lea.vmem %s4, %s393
        $region48: #{dinov2_encoder_forward.1} parent=27 // pred_fallthru
          _
        // Predicated region
        $region49: #{dinov2_encoder_forward.1} parent=27 // pred_check
          %p395 = pneg %p182
        $region50: #{dinov2_encoder_forward.1} parent=27 // pred_check_branch
          %397 = sbr.rel (%p395) target = $region52
        $region51: #{dinov2_encoder_forward.1} parent=27 // pred_region
          %p398 = scmp.lt.s32.totalorder %s28, 1
          %s399 = scalar_select %p398, %s28, 1
          %s400 = smul.addr %s399, 4
          %s401 = smul.addr %s400, 4
          %s402 = scalar_lea.vmem %s5, %s401
        $region52: #{dinov2_encoder_forward.1} parent=27 // pred_fallthru
          _
        // Predicated region
        $region53: #{dinov2_encoder_forward.1} parent=27 // pred_check
          %p403 = pneg %p208
        $region54: #{dinov2_encoder_forward.1} parent=27 // pred_check_branch
          %405 = sbr.rel (%p403) target = $region56
        $region55: #{dinov2_encoder_forward.1} parent=27 // pred_region
          %p406 = scmp.lt.s32.totalorder %s28, 1
          %s407 = scalar_select %p406, %s28, 1
          %s408 = scalar_lea.vmem %s6, %s407
        $region56: #{dinov2_encoder_forward.1} parent=27 // pred_fallthru
          _
        // Predicated region
        $region57: #{dinov2_encoder_forward.1} parent=27 // pred_check
          %p409 = pneg %p234
        $region58: #{dinov2_encoder_forward.1} parent=27 // pred_check_branch
          %411 = sbr.rel (%p409) target = $region60
        $region59: #{dinov2_encoder_forward.1} parent=27 // pred_region
          %p412 = scmp.lt.s32.totalorder %s28, 1
          %s413 = scalar_select %p412, %s28, 1
          %s414 = smul.addr %s413, 16
          %s415 = smul.addr %s414, 4
          %s416 = scalar_lea.vmem %s7, %s415
        $region60: #{dinov2_encoder_forward.1} parent=27 // pred_fallthru
          _
      $region28: #{dinov2_encoder_forward.1} parent=5 // pred_fallthru
        _
      %p417 = scmp.le.s32.totalorder 1, %s20
      %p418 = scmp.lt.s32.totalorder %s20, 5
      %p419 = pnand %p417, %p418
      %p420 = pneg %p419
      // Predicated region
      $region61: #{dinov2_encoder_forward.1} parent=5 // pred_check
        _
      $region62: #{dinov2_encoder_forward.1} parent=5 // pred_check_branch
        %422 = sbr.rel (%p419) target = $region64
      $region63: #{dinov2_encoder_forward.1} parent=5 // pred_region
        %s423 = ssub.s32 %s20, 1
        %s424 = smul.u32 2, %s29
        %p425 = scmp.lt.s32.totalorder %s424, 3
        %s426 = scalar_select %p425, %s424, 3
        %s427 = smul.addr %s426, 8
        %s428 = scalar_lea.vmem %s0, %s427
        %p429 = pneg %p58
        %p430 = pneg %p55
        %p431 = scmp.lt.s32.totalorder %s30, 1
        %s432 = scalar_select %p431, %s30, 1
        %s433 = smul.addr %s432, 8
        %s434 = scalar_lea.vmem %s1, %s433
        %p435 = pneg %p84
        %p436 = pneg %p81
        %p437 = scmp.lt.s32.totalorder %s30, 1
        %s438 = scalar_select %p437, %s30, 1
        %s439 = smul.addr %s438, 4
        %s440 = smul.addr %s439, 4
        %s441 = scalar_lea.vmem %s2, %s440
        %p442 = pneg %p110
        %p443 = pneg %p107
        %p444 = scmp.lt.s32.totalorder %s30, 1
        %s445 = scalar_select %p444, %s30, 1
        %s446 = scalar_lea.vmem %s3, %s445
        %p447 = pneg %p136
        %p448 = pneg %p133
        %p449 = scmp.lt.s32.totalorder %s30, 1
        %s450 = scalar_select %p449, %s30, 1
        %s451 = smul.addr %s450, 4
        %s452 = smul.addr %s451, 4
        %s453 = scalar_lea.vmem %s4, %s452
        %p454 = pneg %p162
        %p455 = pneg %p159
        %p456 = scmp.lt.s32.totalorder %s30, 1
        %s457 = scalar_select %p456, %s30, 1
        %s458 = smul.addr %s457, 4
        %s459 = smul.addr %s458, 4
        %s460 = scalar_lea.vmem %s5, %s459
        %p461 = pneg %p188
        %p462 = pneg %p185
        %p463 = scmp.lt.s32.totalorder %s30, 1
        %s464 = scalar_select %p463, %s30, 1
        %s465 = scalar_lea.vmem %s6, %s464
        %p466 = pneg %p214
        %p467 = pneg %p211
        %p468 = scmp.lt.s32.totalorder %s30, 1
        %s469 = scalar_select %p468, %s30, 1
        %s470 = smul.addr %s469, 16
        %s471 = smul.addr %s470, 4
        %s472 = scalar_lea.vmem %s7, %s471
        %p473 = pneg %p240
        %p474 = pneg %p237
        %p475 = pneg %p261
        %p476 = pneg %p258
        %p477 = pneg %p282
        %p478 = pneg %p279
        %p479 = pneg %p303
        %p480 = pneg %p300
        %p481 = pneg %p329
        %p482 = pneg %p326
        %s483 = sand.u32 %s316, 1
        %s484 = scalar_lea.sflag [#allocation5], %s483
        %s485 = sand.u32 %s316, 1
        %s486 = smul.addr %s485, 2
        %s487 = scalar_lea.vmem [#allocation4], %s486
        %s488 = smul.u32 2, %s29
        %p489 = scmp.lt.s32.totalorder %s488, 3
        %s490 = scalar_select %p489, %s488, 3
        %s491 = smul.addr %s490, 8
        %s492 = scalar_lea.vmem %s0, %s491
        %s493 = smul.u32 2, %s29
        %p494 = scmp.lt.s32.totalorder %s30, 1
        %s495 = scalar_select %p494, %s30, 1
        %s496 = smul.addr %s495, 8
        %s497 = scalar_lea.vmem %s1, %s496
        %p498 = scmp.lt.s32.totalorder %s30, 1
        %s499 = scalar_select %p498, %s30, 1
        %s500 = smul.addr %s499, 4
        %s501 = smul.addr %s500, 4
        %s502 = scalar_lea.vmem %s2, %s501
        %p503 = scmp.lt.s32.totalorder %s30, 1
        %s504 = scalar_select %p503, %s30, 1
        %s505 = scalar_lea.vmem %s3, %s504
        %p506 = scmp.lt.s32.totalorder %s30, 1
        %s507 = scalar_select %p506, %s30, 1
        %s508 = smul.addr %s507, 4
        %s509 = smul.addr %s508, 4
        %s510 = scalar_lea.vmem %s4, %s509
        %p511 = scmp.lt.s32.totalorder %s30, 1
        %s512 = scalar_select %p511, %s30, 1
        %s513 = smul.addr %s512, 4
        %s514 = smul.addr %s513, 4
        %s515 = scalar_lea.vmem %s5, %s514
        %p516 = scmp.lt.s32.totalorder %s30, 1
        %s517 = scalar_select %p516, %s30, 1
        %s518 = scalar_lea.vmem %s6, %s517
        %p519 = scmp.lt.s32.totalorder %s30, 1
        %s520 = scalar_select %p519, %s30, 1
        %s521 = smul.addr %s520, 16
        %s522 = smul.addr %s521, 4
        %s523 = scalar_lea.vmem %s7, %s522
        %p525 = scmp.eq.s32.totalorder %s30, 0
        // Predicated region
        $region65: #{dinov2_encoder_forward.1} parent=63 // pred_check
          %p526 = pneg %p525
        $region66: #{dinov2_encoder_forward.1} parent=63 // pred_check_branch
          %528 = sbr.rel (%p526) target = $region68
        $region67: #{dinov2_encoder_forward.1} parent=63 // pred_region
          %v529 = vld [vmem:[%s492] sm:$0xff]
          %v530 = vld [vmem:[%s492 + $0x8] sm:$0xff]
          %vm531 = vcmask 261120
          %532 = vst.msk [vmem:[#allocation2] sm:$0xff] %vm531, %v529
          %533 = vst.msk [vmem:[#allocation2 + $0x8] sm:$0xff] %vm531, %v530
          %534 = vst.msk [vmem:[#allocation3] sm:$0xff] %vm531, 0.0
          %535 = vst.msk [vmem:[#allocation3 + $0x8] sm:$0xff] %vm531, 0.0
        $region68: #{dinov2_encoder_forward.1} parent=63 // pred_fallthru
          _
        %v536 = vld [vmem:[%s497] sm:$0x3f]
        %v537 = vld [vmem:[#allocation2] sm:$0xff]
        %v538 = vld [vmem:[#allocation2 + $0x8] sm:$0xff]
        %vm539 = vcmask 261120
        %v540 = vsel %vm539, %v537, 0.0
        %541 = vadd.xlane.f32.xlu0 %v540
        %v542 = vpop.xlane.xlu0 %541
        %v543 = vsel %vm539, %v538, 0.0
        %544 = vadd.xlane.f32.xlu0 %v543
        %v545 = vpop.xlane.xlu0 %544
        %v546 = vrcp.pop 32.0
        %v547 = vmul.f32 32.0, %v546
        %v548 = vsub.f32 1.0, %v547
        %v549 = vmul.f32 %v546, %v548
        %v550 = vadd.f32 %v546, %v549
        %vm551 = vweird.f32 %v546
        %v552 = vsel %vm551, %v546, %v550
        %v553 = vmul.f32 %v542, %v552
        %v554 = vmul.f32 %v545, %v552
        %v555 = vsub.f32 %v537, %v553
        %v556 = vsub.f32 %v538, %v554
        %v557 = vmul.f32 %v555, %v555
        %v558 = vmul.f32 %v556, %v556
        %v559 = vsel %vm539, %v557, 0.0
        %560 = vadd.xlane.f32.xlu0 %v559
        %v561 = vpop.xlane.xlu0 %560
        %v562 = vsel %vm539, %v558, 0.0
        %563 = vadd.xlane.f32.xlu0 %v562
        %v564 = vpop.xlane.xlu0 %563
        %v565 = vmul.f32 %v561, %v552
        %v566 = vmul.f32 %v564, %v552
        %v567 = vadd.f32 %v565, 1e-06
        %v568 = vadd.f32 %v566, 1e-06
        %v569 = vrsqrt.pop %v567
        %v570 = vmul.f32 %v569, %v567
        %v571 = vmul.f32 %v570, %v569
        %v572 = vmul.f32 0.5, %v571
        %v573 = vsub.f32 1.5, %v572
        %v574 = vmul.f32 %v569, %v573
        %vm575 = vweird.f32 %v567
        %vm576 = vweird.f32 %v569
        %vm577 = vmor %vm575, %vm576
        %v578 = vsel %vm577, %v569, %v574
        %v579 = vrsqrt.pop %v568
        %v580 = vmul.f32 %v579, %v568
        %v581 = vmul.f32 %v580, %v579
        %v582 = vmul.f32 0.5, %v581
        %v583 = vsub.f32 1.5, %v582
        %v584 = vmul.f32 %v579, %v583
        %vm585 = vweird.f32 %v568
        %vm586 = vweird.f32 %v579
        %vm587 = vmor %vm585, %vm586
        %v588 = vsel %vm587, %v579, %v584
        %v589 = vmul.f32 %v555, %v578
        %v590 = vmul.f32 %v556, %v588
        %v591 = vperm.slane %v536, 0
        %v592 = vmul.f32 %v589, %v591
        %v593 = vmul.f32 %v590, %v591
        %v594 = vperm.slane %v536, 1
        %v595 = vadd.f32 %v592, %v594
        %v596 = vadd.f32 %v593, %v594
        %v597 = vpack.c.bf16 %v596, %v595
        %v598 = vld [vmem:[%s502] sm:$0xf]
        %v599 = vld [vmem:[%s502 + $0x4] sm:$0xf]
        %v600 = vld [vmem:[%s502 + $0x8] sm:$0xf]
        %v601 = vld [vmem:[%s502 + $0xc] sm:$0xf]
        %v602 = vld [vmem:[%s505] sm:$0x1]
        %v604 = vperm.slane %v602, 0
        %v610 = vunpack.c.l.b16 %v598
        %v611 = vunpack.c.l.b16 %v599
        %v612 = vunpack.c.l.b16 %v600
        %v613 = vunpack.c.l.b16 %v601
        %v614 = vpack.c.b16 %v611, %v610
        %v615 = vpack.c.b16 %v613, %v612
        %v619 = vsel %vm539, %v597, 0
        %621 = vmatpush.bf16.msra.mxu0 0
        %622 = vmatpush.bf16.msra.mxu0 0
        %623 = vmatpush.bf16.msra.mxu0 0
        %624 = vmatpush.bf16.msra.mxu0 0
        %625 = vmatpush.bf16.msra.mxu0 0
        %626 = vmatpush.bf16.msra.mxu0 0
        %627 = vmatpush.bf16.msra.mxu0 %v615
        %628 = vmatpush.bf16.msra.mxu0 %v614
        %629 = vmatmul.bf16.gmra.mxu0 %v619
        %v630 = vpop.f32.mrf.mxu0
        %v631 = vadd.f32 %v604, %v630
        %v632 = vpop.f32.mrf.mxu0
        %v633 = vadd.f32 %v604, %v632
        %634 = vdwg.mxu0
        %636 = vrot.lane.b32.xlu0 %v631, 96
        %v637 = vpop.permute.xlu0 %636
        %vm638 = vcmask 64512
        %v639 = vsel %vm638, %v631, 0
        %v641 = vsel %vm638, %v637, 0
        %643 = vmatpush.xpose.msra.mxu0 0.0
        %644 = vmatpush.xpose.msra.mxu0 0.0
        %645 = vmatpush.xpose.msra.mxu0 0.0
        %646 = vmatpush.xpose.msra.mxu0 0.0
        %647 = vmatpush.xpose.msra.mxu0 0.0
        %648 = vmatpush.xpose.msra.mxu0 0.0
        %649 = vmatpush.xpose.msra.mxu0 0.0
        %650 = vmatpush.xpose.msra.mxu0 0.0
        %651 = vmatpush.xpose.msra.mxu0 0.0
        %652 = vmatpush.xpose.msra.mxu0 0.0
        %653 = vmatpush.xpose.msra.mxu0 0.0
        %654 = vmatpush.xpose.msra.mxu0 0.0
        %655 = vmatpush.xpose.msra.mxu0 0.0
        %656 = vmatpush.xpose.msra.mxu0 0.0
        %657 = vmatpush.xpose.msra.mxu0 0.0
        %658 = vmatpush.xpose.msra.mxu0 %v641
        %659 = vmatmul.f32.gmra.mxu0 %v639
        %v660 = vpop.f32.mrf.mxu0
        %v661 = vadd.f32 0.0, %v660
        %662 = vdwg.mxu0
        %vm663 = vcmask 36864
        %v664 = vsel %vm663, %v661, -inf
        %665 = vmax.xlane.f32.xlu0 %v664
        %v666 = vpop.xlane.xlu0 %665
        %v667 = vsub.f32 %v661, %v666
        %v668 = vmul.f32 %v667, 1.442695
        %v669 = vpow.pop %v668
        %v670 = vsel %vm663, %v669, 0.0
        %671 = vadd.xlane.f32.xlu0 %v670
        %v672 = vpop.xlane.xlu0 %671
        %v673 = vrcp.pop %v672
        %v674 = vmul.f32 %v669, %v673
        %675 = vrot.lane.b32.xlu0 %v631, 64
        %v676 = vpop.permute.xlu0 %675
        %vm677 = vcmask 39936
        %v679 = vsel %vm677, %v674, 0
        %vm681 = vcmask 1044480
        %v682 = vsel %vm681, %v676, 0
        %684 = vmatpush.msra.mxu0 0.0
        %685 = vmatpush.msra.mxu0 0.0
        %686 = vmatpush.msra.mxu0 0.0
        %687 = vmatpush.msra.mxu0 0.0
        %688 = vmatpush.msra.mxu0 0.0
        %689 = vmatpush.msra.mxu0 0.0
        %690 = vmatpush.msra.mxu0 0.0
        %691 = vmatpush.msra.mxu0 0.0
        %692 = vmatpush.msra.mxu0 0.0
        %693 = vmatpush.msra.mxu0 0.0
        %694 = vmatpush.msra.mxu0 0.0
        %695 = vmatpush.msra.mxu0 0.0
        %696 = vmatpush.msra.mxu0 0.0
        %697 = vmatpush.msra.mxu0 0.0
        %698 = vmatpush.msra.mxu0 0.0
        %699 = vmatpush.msra.mxu0 %v682
        %700 = vmatmul.f32.gmra.mxu0 %v679
        %v701 = vpop.f32.mrf.mxu0
        %v702 = vadd.f32 0.0, %v701
        %703 = vdwg.mxu0
        %vm704 = vcmask 61440
        %705 = vst.msk [vmem:[#allocation3] sm:$0x1f] %vm704, %v702
        %706 = vrot.lane.b32.xlu0 %v631, 120
        %v707 = vpop.permute.xlu0 %706
        %708 = vrot.lane.b32.xlu0 %v631, 88
        %v709 = vpop.permute.xlu0 %708
        %v710 = vsel %vm638, %v707, 0
        %v712 = vsel %vm638, %v709, 0
        %714 = vmatpush.xpose.msra.mxu0 0.0
        %715 = vmatpush.xpose.msra.mxu0 0.0
        %716 = vmatpush.xpose.msra.mxu0 0.0
        %717 = vmatpush.xpose.msra.mxu0 0.0
        %718 = vmatpush.xpose.msra.mxu0 0.0
        %719 = vmatpush.xpose.msra.mxu0 0.0
        %720 = vmatpush.xpose.msra.mxu0 0.0
        %721 = vmatpush.xpose.msra.mxu0 0.0
        %722 = vmatpush.xpose.msra.mxu0 0.0
        %723 = vmatpush.xpose.msra.mxu0 0.0
        %724 = vmatpush.xpose.msra.mxu0 0.0
        %725 = vmatpush.xpose.msra.mxu0 0.0
        %726 = vmatpush.xpose.msra.mxu0 0.0
        %727 = vmatpush.xpose.msra.mxu0 0.0
        %728 = vmatpush.xpose.msra.mxu0 0.0
        %729 = vmatpush.xpose.msra.mxu0 %v712
        %730 = vmatmul.f32.gmra.mxu0 %v710
        %v731 = vpop.f32.mrf.mxu0
        %v732 = vadd.f32 0.0, %v731
        %733 = vdwg.mxu0
        %v734 = vsel %vm663, %v732, -inf
        %735 = vmax.xlane.f32.xlu0 %v734
        %v736 = vpop.xlane.xlu0 %735
        %v737 = vsub.f32 %v732, %v736
        %v738 = vmul.f32 %v737, 1.442695
        %v739 = vpow.pop %v738
        %v740 = vsel %vm663, %v739, 0.0
        %741 = vadd.xlane.f32.xlu0 %v740
        %v742 = vpop.xlane.xlu0 %741
        %v743 = vrcp.pop %v742
        %v744 = vmul.f32 %v739, %v743
        %745 = vrot.lane.b32.xlu0 %v631, 56
        %v746 = vpop.permute.xlu0 %745
        %v748 = vsel %vm677, %v744, 0
        %v750 = vsel %vm681, %v746, 0
        %752 = vmatpush.msra.mxu0 0.0
        %753 = vmatpush.msra.mxu0 0.0
        %754 = vmatpush.msra.mxu0 0.0
        %755 = vmatpush.msra.mxu0 0.0
        %756 = vmatpush.msra.mxu0 0.0
        %757 = vmatpush.msra.mxu0 0.0
        %758 = vmatpush.msra.mxu0 0.0
        %759 = vmatpush.msra.mxu0 0.0
        %760 = vmatpush.msra.mxu0 0.0
        %761 = vmatpush.msra.mxu0 0.0
        %762 = vmatpush.msra.mxu0 0.0
        %763 = vmatpush.msra.mxu0 0.0
        %764 = vmatpush.msra.mxu0 0.0
        %765 = vmatpush.msra.mxu0 0.0
        %766 = vmatpush.msra.mxu0 0.0
        %767 = vmatpush.msra.mxu0 %v750
        %768 = vmatmul.f32.gmra.mxu0 %v748
        %v769 = vpop.f32.mrf.mxu0
        %v770 = vadd.f32 0.0, %v769
        %771 = vdwg.mxu0
        %773 = vrot.lane.b32.xlu0 %v770, 8
        %v774 = vpop.permute.xlu0 %773
        %vm776 = vcmask 127040
        %777 = vst.msk [vmem:[#allocation3] sm:$0x1f] %vm776, %v774
        %778 = vrot.lane.b32.xlu0 %v631, 112
        %v779 = vpop.permute.xlu0 %778
        %780 = vrot.lane.b32.xlu0 %v631, 80
        %v781 = vpop.permute.xlu0 %780
        %v782 = vsel %vm638, %v779, 0
        %v784 = vsel %vm638, %v781, 0
        %786 = vmatpush.xpose.msra.mxu0 0.0
        %787 = vmatpush.xpose.msra.mxu0 0.0
        %788 = vmatpush.xpose.msra.mxu0 0.0
        %789 = vmatpush.xpose.msra.mxu0 0.0
        %790 = vmatpush.xpose.msra.mxu0 0.0
        %791 = vmatpush.xpose.msra.mxu0 0.0
        %792 = vmatpush.xpose.msra.mxu0 0.0
        %793 = vmatpush.xpose.msra.mxu0 0.0
        %794 = vmatpush.xpose.msra.mxu0 0.0
        %795 = vmatpush.xpose.msra.mxu0 0.0
        %796 = vmatpush.xpose.msra.mxu0 0.0
        %797 = vmatpush.xpose.msra.mxu0 0.0
        %798 = vmatpush.xpose.msra.mxu0 0.0
        %799 = vmatpush.xpose.msra.mxu0 0.0
        %800 = vmatpush.xpose.msra.mxu0 0.0
        %801 = vmatpush.xpose.msra.mxu0 %v784
        %802 = vmatmul.f32.gmra.mxu0 %v782
        %v803 = vpop.f32.mrf.mxu0
        %v804 = vadd.f32 0.0, %v803
        %805 = vdwg.mxu0
        %v806 = vsel %vm663, %v804, -inf
        %807 = vmax.xlane.f32.xlu0 %v806
        %v808 = vpop.xlane.xlu0 %807
        %v809 = vsub.f32 %v804, %v808
        %v810 = vmul.f32 %v809, 1.442695
        %v811 = vpow.pop %v810
        %v812 = vsel %vm663, %v811, 0.0
        %813 = vadd.xlane.f32.xlu0 %v812
        %v814 = vpop.xlane.xlu0 %813
        %v815 = vrcp.pop %v814
        %v816 = vmul.f32 %v811, %v815
        %817 = vrot.lane.b32.xlu0 %v631, 48
        %v818 = vpop.permute.xlu0 %817
        %v820 = vsel %vm677, %v816, 0
        %v822 = vsel %vm681, %v818, 0
        %824 = vmatpush.msra.mxu0 0.0
        %825 = vmatpush.msra.mxu0 0.0
        %826 = vmatpush.msra.mxu0 0.0
        %827 = vmatpush.msra.mxu0 0.0
        %828 = vmatpush.msra.mxu0 0.0
        %829 = vmatpush.msra.mxu0 0.0
        %830 = vmatpush.msra.mxu0 0.0
        %831 = vmatpush.msra.mxu0 0.0
        %832 = vmatpush.msra.mxu0 0.0
        %833 = vmatpush.msra.mxu0 0.0
        %834 = vmatpush.msra.mxu0 0.0
        %835 = vmatpush.msra.mxu0 0.0
        %836 = vmatpush.msra.mxu0 0.0
        %837 = vmatpush.msra.mxu0 0.0
        %838 = vmatpush.msra.mxu0 0.0
        %839 = vmatpush.msra.mxu0 %v822
        %840 = vmatmul.f32.gmra.mxu0 %v820
        %v841 = vpop.f32.mrf.mxu0
        %v842 = vadd.f32 0.0, %v841
        %843 = vdwg.mxu0
        %845 = vrot.lane.b32.xlu0 %v842, 16
        %v846 = vpop.permute.xlu0 %845
        %vm848 = vcmask 192640
        %849 = vst.msk [vmem:[#allocation3] sm:$0x1f] %vm848, %v846
        %850 = vrot.lane.b32.xlu0 %v631, 104
        %v851 = vpop.permute.xlu0 %850
        %852 = vrot.lane.b32.xlu0 %v631, 72
        %v853 = vpop.permute.xlu0 %852
        %v854 = vsel %vm638, %v851, 0
        %v856 = vsel %vm638, %v853, 0
        %858 = vmatpush.xpose.msra.mxu0 0.0
        %859 = vmatpush.xpose.msra.mxu0 0.0
        %860 = vmatpush.xpose.msra.mxu0 0.0
        %861 = vmatpush.xpose.msra.mxu0 0.0
        %862 = vmatpush.xpose.msra.mxu0 0.0
        %863 = vmatpush.xpose.msra.mxu0 0.0
        %864 = vmatpush.xpose.msra.mxu0 0.0
        %865 = vmatpush.xpose.msra.mxu0 0.0
        %866 = vmatpush.xpose.msra.mxu0 0.0
        %867 = vmatpush.xpose.msra.mxu0 0.0
        %868 = vmatpush.xpose.msra.mxu0 0.0
        %869 = vmatpush.xpose.msra.mxu0 0.0
        %870 = vmatpush.xpose.msra.mxu0 0.0
        %871 = vmatpush.xpose.msra.mxu0 0.0
        %872 = vmatpush.xpose.msra.mxu0 0.0
        %873 = vmatpush.xpose.msra.mxu0 %v856
        %874 = vmatmul.f32.gmra.mxu0 %v854
        %v875 = vpop.f32.mrf.mxu0
        %v876 = vadd.f32 0.0, %v875
        %877 = vdwg.mxu0
        %v878 = vsel %vm663, %v876, -inf
        %879 = vmax.xlane.f32.xlu0 %v878
        %v880 = vpop.xlane.xlu0 %879
        %v881 = vsub.f32 %v876, %v880
        %v882 = vmul.f32 %v881, 1.442695
        %v883 = vpow.pop %v882
        %v884 = vsel %vm663, %v883, 0.0
        %885 = vadd.xlane.f32.xlu0 %v884
        %v886 = vpop.xlane.xlu0 %885
        %v887 = vrcp.pop %v886
        %v888 = vmul.f32 %v883, %v887
        %889 = vrot.lane.b32.xlu0 %v631, 40
        %v890 = vpop.permute.xlu0 %889
        %v892 = vsel %vm677, %v888, 0
        %v894 = vsel %vm681, %v890, 0
        %896 = vmatpush.msra.mxu0 0.0
        %897 = vmatpush.msra.mxu0 0.0
        %898 = vmatpush.msra.mxu0 0.0
        %899 = vmatpush.msra.mxu0 0.0
        %900 = vmatpush.msra.mxu0 0.0
        %901 = vmatpush.msra.mxu0 0.0
        %902 = vmatpush.msra.mxu0 0.0
        %903 = vmatpush.msra.mxu0 0.0
        %904 = vmatpush.msra.mxu0 0.0
        %905 = vmatpush.msra.mxu0 0.0
        %906 = vmatpush.msra.mxu0 0.0
        %907 = vmatpush.msra.mxu0 0.0
        %908 = vmatpush.msra.mxu0 0.0
        %909 = vmatpush.msra.mxu0 0.0
        %910 = vmatpush.msra.mxu0 0.0
        %911 = vmatpush.msra.mxu0 %v894
        %912 = vmatmul.f32.gmra.mxu0 %v892
        %v913 = vpop.f32.mrf.mxu0
        %v914 = vadd.f32 0.0, %v913
        %915 = vdwg.mxu0
        %917 = vrot.lane.b32.xlu0 %v914, 24
        %v918 = vpop.permute.xlu0 %917
        %vm920 = vcmask 258240
        %921 = vst.msk [vmem:[#allocation3] sm:$0x1f] %vm920, %v918
        %923 = vrot.lane.b32.xlu0 %v633, 96
        %v924 = vpop.permute.xlu0 %923
        %v925 = vsel %vm638, %v633, 0
        %v927 = vsel %vm638, %v924, 0
        %929 = vmatpush.xpose.msra.mxu0 0.0
        %930 = vmatpush.xpose.msra.mxu0 0.0
        %931 = vmatpush.xpose.msra.mxu0 0.0
        %932 = vmatpush.xpose.msra.mxu0 0.0
        %933 = vmatpush.xpose.msra.mxu0 0.0
        %934 = vmatpush.xpose.msra.mxu0 0.0
        %935 = vmatpush.xpose.msra.mxu0 0.0
        %936 = vmatpush.xpose.msra.mxu0 0.0
        %937 = vmatpush.xpose.msra.mxu0 0.0
        %938 = vmatpush.xpose.msra.mxu0 0.0
        %939 = vmatpush.xpose.msra.mxu0 0.0
        %940 = vmatpush.xpose.msra.mxu0 0.0
        %941 = vmatpush.xpose.msra.mxu0 0.0
        %942 = vmatpush.xpose.msra.mxu0 0.0
        %943 = vmatpush.xpose.msra.mxu0 0.0
        %944 = vmatpush.xpose.msra.mxu0 %v927
        %945 = vmatmul.f32.gmra.mxu0 %v925
        %v946 = vpop.f32.mrf.mxu0
        %v947 = vadd.f32 0.0, %v946
        %948 = vdwg.mxu0
        %v949 = vsel %vm663, %v947, -inf
        %950 = vmax.xlane.f32.xlu0 %v949
        %v951 = vpop.xlane.xlu0 %950
        %v952 = vsub.f32 %v947, %v951
        %v953 = vmul.f32 %v952, 1.442695
        %v954 = vpow.pop %v953
        %v955 = vsel %vm663, %v954, 0.0
        %956 = vadd.xlane.f32.xlu0 %v955
        %v957 = vpop.xlane.xlu0 %956
        %v958 = vrcp.pop %v957
        %v959 = vmul.f32 %v954, %v958
        %960 = vrot.lane.b32.xlu0 %v633, 64
        %v961 = vpop.permute.xlu0 %960
        %v963 = vsel %vm677, %v959, 0
        %v965 = vsel %vm681, %v961, 0
        %967 = vmatpush.msra.mxu0 0.0
        %968 = vmatpush.msra.mxu0 0.0
        %969 = vmatpush.msra.mxu0 0.0
        %970 = vmatpush.msra.mxu0 0.0
        %971 = vmatpush.msra.mxu0 0.0
        %972 = vmatpush.msra.mxu0 0.0
        %973 = vmatpush.msra.mxu0 0.0
        %974 = vmatpush.msra.mxu0 0.0
        %975 = vmatpush.msra.mxu0 0.0
        %976 = vmatpush.msra.mxu0 0.0
        %977 = vmatpush.msra.mxu0 0.0
        %978 = vmatpush.msra.mxu0 0.0
        %979 = vmatpush.msra.mxu0 0.0
        %980 = vmatpush.msra.mxu0 0.0
        %981 = vmatpush.msra.mxu0 0.0
        %982 = vmatpush.msra.mxu0 %v965
        %983 = vmatmul.f32.gmra.mxu0 %v963
        %v984 = vpop.f32.mrf.mxu0
        %v985 = vadd.f32 0.0, %v984
        %986 = vdwg.mxu0
        %987 = vst.msk [vmem:[#allocation3 + $0x8] sm:$0x1f] %vm704, %v985
        %988 = vrot.lane.b32.xlu0 %v633, 120
        %v989 = vpop.permute.xlu0 %988
        %990 = vrot.lane.b32.xlu0 %v633, 88
        %v991 = vpop.permute.xlu0 %990
        %v992 = vsel %vm638, %v989, 0
        %v994 = vsel %vm638, %v991, 0
        %996 = vmatpush.xpose.msra.mxu0 0.0
        %997 = vmatpush.xpose.msra.mxu0 0.0
        %998 = vmatpush.xpose.msra.mxu0 0.0
        %999 = vmatpush.xpose.msra.mxu0 0.0
        %1000 = vmatpush.xpose.msra.mxu0 0.0
        %1001 = vmatpush.xpose.msra.mxu0 0.0
        %1002 = vmatpush.xpose.msra.mxu0 0.0
        %1003 = vmatpush.xpose.msra.mxu0 0.0
        %1004 = vmatpush.xpose.msra.mxu0 0.0
        %1005 = vmatpush.xpose.msra.mxu0 0.0
        %1006 = vmatpush.xpose.msra.mxu0 0.0
        %1007 = vmatpush.xpose.msra.mxu0 0.0
        %1008 = vmatpush.xpose.msra.mxu0 0.0
        %1009 = vmatpush.xpose.msra.mxu0 0.0
        %1010 = vmatpush.xpose.msra.mxu0 0.0
        %1011 = vmatpush.xpose.msra.mxu0 %v994
        %1012 = vmatmul.f32.gmra.mxu0 %v992
        %v1013 = vpop.f32.mrf.mxu0
        %v1014 = vadd.f32 0.0, %v1013
        %1015 = vdwg.mxu0
        %v1016 = vsel %vm663, %v1014, -inf
        %1017 = vmax.xlane.f32.xlu0 %v1016
        %v1018 = vpop.xlane.xlu0 %1017
        %v1019 = vsub.f32 %v1014, %v1018
        %v1020 = vmul.f32 %v1019, 1.442695
        %v1021 = vpow.pop %v1020
        %v1022 = vsel %vm663, %v1021, 0.0
        %1023 = vadd.xlane.f32.xlu0 %v1022
        %v1024 = vpop.xlane.xlu0 %1023
        %v1025 = vrcp.pop %v1024
        %v1026 = vmul.f32 %v1021, %v1025
        %1027 = vrot.lane.b32.xlu0 %v633, 56
        %v1028 = vpop.permute.xlu0 %1027
        %v1030 = vsel %vm677, %v1026, 0
        %v1032 = vsel %vm681, %v1028, 0
        %1034 = vmatpush.msra.mxu0 0.0
        %1035 = vmatpush.msra.mxu0 0.0
        %1036 = vmatpush.msra.mxu0 0.0
        %1037 = vmatpush.msra.mxu0 0.0
        %1038 = vmatpush.msra.mxu0 0.0
        %1039 = vmatpush.msra.mxu0 0.0
        %1040 = vmatpush.msra.mxu0 0.0
        %1041 = vmatpush.msra.mxu0 0.0
        %1042 = vmatpush.msra.mxu0 0.0
        %1043 = vmatpush.msra.mxu0 0.0
        %1044 = vmatpush.msra.mxu0 0.0
        %1045 = vmatpush.msra.mxu0 0.0
        %1046 = vmatpush.msra.mxu0 0.0
        %1047 = vmatpush.msra.mxu0 0.0
        %1048 = vmatpush.msra.mxu0 0.0
        %1049 = vmatpush.msra.mxu0 %v1032
        %1050 = vmatmul.f32.gmra.mxu0 %v1030
        %v1051 = vpop.f32.mrf.mxu0
        %v1052 = vadd.f32 0.0, %v1051
        %1053 = vdwg.mxu0
        %1055 = vrot.lane.b32.xlu0 %v1052, 8
        %v1056 = vpop.permute.xlu0 %1055
        %1058 = vst.msk [vmem:[#allocation3 + $0x8] sm:$0x1f] %vm776, %v1056
        %1059 = vrot.lane.b32.xlu0 %v633, 112
        %v1060 = vpop.permute.xlu0 %1059
        %1061 = vrot.lane.b32.xlu0 %v633, 80
        %v1062 = vpop.permute.xlu0 %1061
        %v1063 = vsel %vm638, %v1060, 0
        %v1065 = vsel %vm638, %v1062, 0
        %1067 = vmatpush.xpose.msra.mxu0 0.0
        %1068 = vmatpush.xpose.msra.mxu0 0.0
        %1069 = vmatpush.xpose.msra.mxu0 0.0
        %1070 = vmatpush.xpose.msra.mxu0 0.0
        %1071 = vmatpush.xpose.msra.mxu0 0.0
        %1072 = vmatpush.xpose.msra.mxu0 0.0
        %1073 = vmatpush.xpose.msra.mxu0 0.0
        %1074 = vmatpush.xpose.msra.mxu0 0.0
        %1075 = vmatpush.xpose.msra.mxu0 0.0
        %1076 = vmatpush.xpose.msra.mxu0 0.0
        %1077 = vmatpush.xpose.msra.mxu0 0.0
        %1078 = vmatpush.xpose.msra.mxu0 0.0
        %1079 = vmatpush.xpose.msra.mxu0 0.0
        %1080 = vmatpush.xpose.msra.mxu0 0.0
        %1081 = vmatpush.xpose.msra.mxu0 0.0
        %1082 = vmatpush.xpose.msra.mxu0 %v1065
        %1083 = vmatmul.f32.gmra.mxu0 %v1063
        %v1084 = vpop.f32.mrf.mxu0
        %v1085 = vadd.f32 0.0, %v1084
        %1086 = vdwg.mxu0
        %v1087 = vsel %vm663, %v1085, -inf
        %1088 = vmax.xlane.f32.xlu0 %v1087
        %v1089 = vpop.xlane.xlu0 %1088
        %v1090 = vsub.f32 %v1085, %v1089
        %v1091 = vmul.f32 %v1090, 1.442695
        %v1092 = vpow.pop %v1091
        %v1093 = vsel %vm663, %v1092, 0.0
        %1094 = vadd.xlane.f32.xlu0 %v1093
        %v1095 = vpop.xlane.xlu0 %1094
        %v1096 = vrcp.pop %v1095
        %v1097 = vmul.f32 %v1092, %v1096
        %1098 = vrot.lane.b32.xlu0 %v633, 48
        %v1099 = vpop.permute.xlu0 %1098
        %v1101 = vsel %vm677, %v1097, 0
        %v1103 = vsel %vm681, %v1099, 0
        %1105 = vmatpush.msra.mxu0 0.0
        %1106 = vmatpush.msra.mxu0 0.0
        %1107 = vmatpush.msra.mxu0 0.0
        %1108 = vmatpush.msra.mxu0 0.0
        %1109 = vmatpush.msra.mxu0 0.0
        %1110 = vmatpush.msra.mxu0 0.0
        %1111 = vmatpush.msra.mxu0 0.0
        %1112 = vmatpush.msra.mxu0 0.0
        %1113 = vmatpush.msra.mxu0 0.0
        %1114 = vmatpush.msra.mxu0 0.0
        %1115 = vmatpush.msra.mxu0 0.0
        %1116 = vmatpush.msra.mxu0 0.0
        %1117 = vmatpush.msra.mxu0 0.0
        %1118 = vmatpush.msra.mxu0 0.0
        %1119 = vmatpush.msra.mxu0 0.0
        %1120 = vmatpush.msra.mxu0 %v1103
        %1121 = vmatmul.f32.gmra.mxu0 %v1101
        %v1122 = vpop.f32.mrf.mxu0
        %v1123 = vadd.f32 0.0, %v1122
        %1124 = vdwg.mxu0
        %1126 = vrot.lane.b32.xlu0 %v1123, 16
        %v1127 = vpop.permute.xlu0 %1126
        %1129 = vst.msk [vmem:[#allocation3 + $0x8] sm:$0x1f] %vm848, %v1127
        %1130 = vrot.lane.b32.xlu0 %v633, 104
        %v1131 = vpop.permute.xlu0 %1130
        %1132 = vrot.lane.b32.xlu0 %v633, 72
        %v1133 = vpop.permute.xlu0 %1132
        %v1134 = vsel %vm638, %v1131, 0
        %v1136 = vsel %vm638, %v1133, 0
        %1138 = vmatpush.xpose.msra.mxu0 0.0
        %1139 = vmatpush.xpose.msra.mxu0 0.0
        %1140 = vmatpush.xpose.msra.mxu0 0.0
        %1141 = vmatpush.xpose.msra.mxu0 0.0
        %1142 = vmatpush.xpose.msra.mxu0 0.0
        %1143 = vmatpush.xpose.msra.mxu0 0.0
        %1144 = vmatpush.xpose.msra.mxu0 0.0
        %1145 = vmatpush.xpose.msra.mxu0 0.0
        %1146 = vmatpush.xpose.msra.mxu0 0.0
        %1147 = vmatpush.xpose.msra.mxu0 0.0
        %1148 = vmatpush.xpose.msra.mxu0 0.0
        %1149 = vmatpush.xpose.msra.mxu0 0.0
        %1150 = vmatpush.xpose.msra.mxu0 0.0
        %1151 = vmatpush.xpose.msra.mxu0 0.0
        %1152 = vmatpush.xpose.msra.mxu0 0.0
        %1153 = vmatpush.xpose.msra.mxu0 %v1136
        %1154 = vmatmul.f32.gmra.mxu0 %v1134
        %v1155 = vpop.f32.mrf.mxu0
        %v1156 = vadd.f32 0.0, %v1155
        %1157 = vdwg.mxu0
        %v1158 = vsel %vm663, %v1156, -inf
        %1159 = vmax.xlane.f32.xlu0 %v1158
        %v1160 = vpop.xlane.xlu0 %1159
        %v1161 = vsub.f32 %v1156, %v1160
        %v1162 = vmul.f32 %v1161, 1.442695
        %v1163 = vpow.pop %v1162
        %v1164 = vsel %vm663, %v1163, 0.0
        %1165 = vadd.xlane.f32.xlu0 %v1164
        %v1166 = vpop.xlane.xlu0 %1165
        %v1167 = vrcp.pop %v1166
        %v1168 = vmul.f32 %v1163, %v1167
        %1169 = vrot.lane.b32.xlu0 %v633, 40
        %v1170 = vpop.permute.xlu0 %1169
        %v1172 = vsel %vm677, %v1168, 0
        %v1174 = vsel %vm681, %v1170, 0
        %1176 = vmatpush.msra.mxu0 0.0
        %1177 = vmatpush.msra.mxu0 0.0
        %1178 = vmatpush.msra.mxu0 0.0
        %1179 = vmatpush.msra.mxu0 0.0
        %1180 = vmatpush.msra.mxu0 0.0
        %1181 = vmatpush.msra.mxu0 0.0
        %1182 = vmatpush.msra.mxu0 0.0
        %1183 = vmatpush.msra.mxu0 0.0
        %1184 = vmatpush.msra.mxu0 0.0
        %1185 = vmatpush.msra.mxu0 0.0
        %1186 = vmatpush.msra.mxu0 0.0
        %1187 = vmatpush.msra.mxu0 0.0
        %1188 = vmatpush.msra.mxu0 0.0
        %1189 = vmatpush.msra.mxu0 0.0
        %1190 = vmatpush.msra.mxu0 0.0
        %1191 = vmatpush.msra.mxu0 %v1174
        %1192 = vmatmul.f32.gmra.mxu0 %v1172
        %v1193 = vpop.f32.mrf.mxu0
        %v1194 = vadd.f32 0.0, %v1193
        %1195 = vdwg.mxu0
        %1197 = vrot.lane.b32.xlu0 %v1194, 24
        %v1198 = vpop.permute.xlu0 %1197
        %1200 = vst.msk [vmem:[#allocation3 + $0x8] sm:$0x1f] %vm920, %v1198
        %v1201 = vld [vmem:[#allocation3] sm:$0xff]
        %v1202 = vld [vmem:[#allocation3 + $0x8] sm:$0xff]
        %v1203 = vpack.c.bf16 %v1202, %v1201
        %v1204 = vld [vmem:[%s510] sm:$0xf]
        %v1205 = vld [vmem:[%s510 + $0x4] sm:$0xf]
        %v1206 = vld [vmem:[%s510 + $0x8] sm:$0xf]
        %v1207 = vld [vmem:[%s510 + $0xc] sm:$0xf]
        %v1208 = vperm.slane %v536, 2
        %v1213 = vunpack.c.l.b16 %v1204
        %v1214 = vunpack.c.l.b16 %v1205
        %v1215 = vunpack.c.l.b16 %v1206
        %v1216 = vunpack.c.l.b16 %v1207
        %v1217 = vpack.c.b16 %v1214, %v1213
        %v1218 = vpack.c.b16 %v1216, %v1215
        %v1222 = vsel %vm539, %v1203, 0
        %1224 = vmatpush.bf16.msra.mxu0 0
        %1225 = vmatpush.bf16.msra.mxu0 0
        %1226 = vmatpush.bf16.msra.mxu0 0
        %1227 = vmatpush.bf16.msra.mxu0 0
        %1228 = vmatpush.bf16.msra.mxu0 0
        %1229 = vmatpush.bf16.msra.mxu0 0
        %1230 = vmatpush.bf16.msra.mxu0 %v1218
        %1231 = vmatpush.bf16.msra.mxu0 %v1217
        %1232 = vmatmul.bf16.gmra.mxu0 %v1222
        %v1233 = vpop.f32.mrf.mxu0
        %v1234 = vadd.f32 %v1208, %v1233
        %v1235 = vpop.f32.mrf.mxu0
        %v1236 = vadd.f32 %v1208, %v1235
        %1237 = vdwg.mxu0
        %v1238 = vadd.f32 %v537, %v1234
        %v1239 = vadd.f32 %v538, %v1236
        %v1240 = vsel %vm539, %v1238, 0.0
        %1241 = vadd.xlane.f32.xlu0 %v1240
        %v1242 = vpop.xlane.xlu0 %1241
        %v1243 = vsel %vm539, %v1239, 0.0
        %1244 = vadd.xlane.f32.xlu0 %v1243
        %v1245 = vpop.xlane.xlu0 %1244
        %v1246 = vmul.f32 %v1242, %v552
        %v1247 = vmul.f32 %v1245, %v552
        %v1248 = vsub.f32 %v1238, %v1246
        %v1249 = vsub.f32 %v1239, %v1247
        %v1250 = vmul.f32 %v1248, %v1248
        %v1251 = vmul.f32 %v1249, %v1249
        %v1252 = vsel %vm539, %v1250, 0.0
        %1253 = vadd.xlane.f32.xlu0 %v1252
        %v1254 = vpop.xlane.xlu0 %1253
        %v1255 = vsel %vm539, %v1251, 0.0
        %1256 = vadd.xlane.f32.xlu0 %v1255
        %v1257 = vpop.xlane.xlu0 %1256
        %v1258 = vmul.f32 %v1254, %v552
        %v1259 = vmul.f32 %v1257, %v552
        %v1260 = vadd.f32 %v1258, 1e-06
        %v1261 = vadd.f32 %v1259, 1e-06
        %v1262 = vrsqrt.pop %v1260
        %v1263 = vmul.f32 %v1262, %v1260
        %v1264 = vmul.f32 %v1263, %v1262
        %v1265 = vmul.f32 0.5, %v1264
        %v1266 = vsub.f32 1.5, %v1265
        %v1267 = vmul.f32 %v1262, %v1266
        %vm1268 = vweird.f32 %v1260
        %vm1269 = vweird.f32 %v1262
        %vm1270 = vmor %vm1268, %vm1269
        %v1271 = vsel %vm1270, %v1262, %v1267
        %v1272 = vrsqrt.pop %v1261
        %v1273 = vmul.f32 %v1272, %v1261
        %v1274 = vmul.f32 %v1273, %v1272
        %v1275 = vmul.f32 0.5, %v1274
        %v1276 = vsub.f32 1.5, %v1275
        %v1277 = vmul.f32 %v1272, %v1276
        %vm1278 = vweird.f32 %v1261
        %vm1279 = vweird.f32 %v1272
        %vm1280 = vmor %vm1278, %vm1279
        %v1281 = vsel %vm1280, %v1272, %v1277
        %v1282 = vmul.f32 %v1248, %v1271
        %v1283 = vmul.f32 %v1249, %v1281
        %v1284 = vperm.slane %v536, 3
        %v1285 = vmul.f32 %v1282, %v1284
        %v1286 = vmul.f32 %v1283, %v1284
        %v1287 = vperm.slane %v536, 4
        %v1288 = vadd.f32 %v1285, %v1287
        %v1289 = vadd.f32 %v1286, %v1287
        %v1290 = vpack.c.bf16 %v1289, %v1288
        %v1291 = vld [vmem:[%s515] sm:$0xf]
        %v1292 = vld [vmem:[%s515 + $0x4] sm:$0xf]
        %v1293 = vld [vmem:[%s515 + $0x8] sm:$0xf]
        %v1294 = vld [vmem:[%s515 + $0xc] sm:$0xf]
        %v1295 = vld [vmem:[%s518] sm:$0x1]
        %v1297 = vperm.slane %v1295, 0
        %v1303 = vunpack.c.l.b16 %v1291
        %v1304 = vunpack.c.l.b16 %v1292
        %v1305 = vunpack.c.l.b16 %v1293
        %v1306 = vunpack.c.l.b16 %v1294
        %v1307 = vpack.c.b16 %v1304, %v1303
        %v1308 = vpack.c.b16 %v1306, %v1305
        %v1312 = vsel %vm539, %v1290, 0
        %1314 = vmatpush.bf16.msra.mxu0 0
        %1315 = vmatpush.bf16.msra.mxu0 0
        %1316 = vmatpush.bf16.msra.mxu0 0
        %1317 = vmatpush.bf16.msra.mxu0 0
        %1318 = vmatpush.bf16.msra.mxu0 0
        %1319 = vmatpush.bf16.msra.mxu0 0
        %1320 = vmatpush.bf16.msra.mxu0 %v1308
        %1321 = vmatpush.bf16.msra.mxu0 %v1307
        %1322 = vmatmul.bf16.gmra.mxu0 %v1312
        %v1323 = vpop.f32.mrf.mxu0
        %v1324 = vadd.f32 %v1297, %v1323
        %v1325 = vpop.f32.mrf.mxu0
        %v1326 = vadd.f32 %v1297, %v1325
        %1327 = vdwg.mxu0
        %v1328 = vmul.f32 %v1324, %v1324
        %v1329 = vmul.f32 %v1326, %v1326
        %v1330 = vmul.f32 %v1324, %v1328
        %v1331 = vmul.f32 %v1326, %v1329
        %v1332 = vmul.f32 %v1330, 0.044715
        %v1333 = vmul.f32 %v1331, 0.044715
        %v1334 = vadd.f32 %v1324, %v1332
        %v1335 = vadd.f32 %v1326, %v1333
        %v1336 = vmul.f32 %v1334, 0.7978846
        %v1337 = vmul.f32 %v1335, 0.7978846
        %v1338 = vtanh.pop %v1336
        %v1339 = vtanh.pop %v1337
        %v1340 = vadd.f32 %v1338, 1.0
        %v1341 = vadd.f32 %v1339, 1.0
        %v1342 = vmul.f32 %v1340, 0.5
        %v1343 = vmul.f32 %v1341, 0.5
        %v1344 = vmul.f32 %v1324, %v1342
        %v1345 = vmul.f32 %v1326, %v1343
        %v1346 = vpack.c.bf16 %v1345, %v1344
        %v1347 = vld [vmem:[%s523] sm:$0xf]
        %v1348 = vld [vmem:[%s523 + $0x4] sm:$0xf]
        %v1349 = vld [vmem:[%s523 + $0x8] sm:$0xf]
        %v1350 = vld [vmem:[%s523 + $0xc] sm:$0xf]
        %v1351 = vld [vmem:[%s523 + $0x10] sm:$0xf]
        %v1352 = vld [vmem:[%s523 + $0x14] sm:$0xf]
        %v1353 = vld [vmem:[%s523 + $0x18] sm:$0xf]
        %v1354 = vld [vmem:[%s523 + $0x1c] sm:$0xf]
        %v1355 = vld [vmem:[%s523 + $0x20] sm:$0xf]
        %v1356 = vld [vmem:[%s523 + $0x24] sm:$0xf]
        %v1357 = vld [vmem:[%s523 + $0x28] sm:$0xf]
        %v1358 = vld [vmem:[%s523 + $0x2c] sm:$0xf]
        %v1359 = vld [vmem:[%s523 + $0x30] sm:$0xf]
        %v1360 = vld [vmem:[%s523 + $0x34] sm:$0xf]
        %v1361 = vld [vmem:[%s523 + $0x38] sm:$0xf]
        %v1362 = vld [vmem:[%s523 + $0x3c] sm:$0xf]
        %v1363 = vperm.slane %v536, 5
        %v1380 = vunpack.c.l.b16 %v1347
        %v1381 = vunpack.c.l.b16 %v1348
        %v1382 = vunpack.c.l.b16 %v1349
        %v1383 = vunpack.c.l.b16 %v1350
        %v1384 = vunpack.c.l.b16 %v1351
        %v1385 = vunpack.c.l.b16 %v1352
        %v1386 = vunpack.c.l.b16 %v1353
        %v1387 = vunpack.c.l.b16 %v1354
        %v1388 = vunpack.c.l.b16 %v1355
        %v1389 = vunpack.c.l.b16 %v1356
        %v1390 = vunpack.c.l.b16 %v1357
        %v1391 = vunpack.c.l.b16 %v1358
        %v1392 = vunpack.c.l.b16 %v1359
        %v1393 = vunpack.c.l.b16 %v1360
        %v1394 = vunpack.c.l.b16 %v1361
        %v1395 = vunpack.c.l.b16 %v1362
        %v1396 = vpack.c.b16 %v1381, %v1380
        %v1397 = vpack.c.b16 %v1383, %v1382
        %v1398 = vpack.c.b16 %v1385, %v1384
        %v1399 = vpack.c.b16 %v1387, %v1386
        %v1400 = vpack.c.b16 %v1389, %v1388
        %v1401 = vpack.c.b16 %v1391, %v1390
        %v1402 = vpack.c.b16 %v1393, %v1392
        %v1403 = vpack.c.b16 %v1395, %v1394
        %1412 = vmatpush.bf16.msra.mxu0 %v1403
        %1413 = vmatpush.bf16.msra.mxu0 %v1402
        %1414 = vmatpush.bf16.msra.mxu0 %v1401
        %1415 = vmatpush.bf16.msra.mxu0 %v1400
        %1416 = vmatpush.bf16.msra.mxu0 %v1399
        %1417 = vmatpush.bf16.msra.mxu0 %v1398
        %1418 = vmatpush.bf16.msra.mxu0 %v1397
        %1419 = vmatpush.bf16.msra.mxu0 %v1396
        %1420 = vmatmul.bf16.gmra.mxu0 %v1346
        %v1421 = vpop.f32.mrf.mxu0
        %v1422 = vadd.f32 %v1363, %v1421
        %v1423 = vpop.f32.mrf.mxu0
        %v1424 = vadd.f32 %v1363, %v1423
        %1425 = vdwg.mxu0
        %v1426 = vadd.f32 %v1238, %v1422
        %v1427 = vadd.f32 %v1239, %v1424
        %1428 = vst.msk [vmem:[#allocation2] sm:$0xff] %vm539, %v1426
        %1429 = vst.msk [vmem:[#allocation2 + $0x8] sm:$0xff] %vm539, %v1427
        %p1430 = scmp.eq.s32.totalorder %s30, 1
        // Predicated region
        $region69: #{dinov2_encoder_forward.1} parent=63 // pred_check
          %p1431 = pneg %p1430
        $region70: #{dinov2_encoder_forward.1} parent=63 // pred_check_branch
          %1433 = sbr.rel (%p1431) target = $region72
        $region71: #{dinov2_encoder_forward.1} parent=63 // pred_region
          %v1434 = vld [vmem:[%s8] sm:$0x3]
          %vm1435 = vcmask 253952
          %v1436 = vsel %vm1435, %v1426, 0.0
          %1437 = vadd.xlane.f32.xlu0 %v1436
          %v1438 = vpop.xlane.xlu0 %1437
          %v1439 = vmul.f32 %v1438, %v552
          %v1440 = vsub.f32 %v1426, %v1439
          %v1441 = vmul.f32 %v1440, %v1440
          %v1442 = vsel %vm1435, %v1441, 0.0
          %1443 = vadd.xlane.f32.xlu0 %v1442
          %v1444 = vpop.xlane.xlu0 %1443
          %v1445 = vmul.f32 %v1444, %v552
          %v1446 = vadd.f32 %v1445, 1e-06
          %v1447 = vrsqrt.pop %v1446
          %v1448 = vmul.f32 %v1447, %v1446
          %v1449 = vmul.f32 %v1448, %v1447
          %v1450 = vmul.f32 0.5, %v1449
          %v1451 = vsub.f32 1.5, %v1450
          %v1452 = vmul.f32 %v1447, %v1451
          %vm1453 = vweird.f32 %v1446
          %vm1454 = vweird.f32 %v1447
          %vm1455 = vmor %vm1453, %vm1454
          %v1456 = vsel %vm1455, %v1447, %v1452
          %v1457 = vmul.f32 %v1440, %v1456
          %v1458 = vmul.f32 %v1457, %v1434
          %v1460 = vrot.slane %v1434, 1
          %v1462 = vadd.f32 %v1458, %v1460
          %v1463 = vpack.c.bf16 %v1462, %v1462
          %v1464 = vld [vmem:[%s9] sm:$0xf]
          %v1465 = vld [vmem:[%s9 + $0x4] sm:$0xf]
          %v1466 = vld [vmem:[%s9 + $0x8] sm:$0xf]
          %v1467 = vld [vmem:[%s9 + $0xc] sm:$0xf]
          %v1468 = vld [vmem:[%s10] sm:$0x1]
          %v1473 = vunpack.c.l.b16 %v1464
          %v1474 = vunpack.c.l.b16 %v1465
          %v1475 = vunpack.c.l.b16 %v1466
          %v1476 = vunpack.c.l.b16 %v1467
          %v1477 = vpack.c.b16 %v1474, %v1473
          %v1478 = vpack.c.b16 %v1476, %v1475
          %v1482 = vsel %vm539, %v1463, 0
          %1484 = vmatpush.bf16.msra.mxu0 0
          %1485 = vmatpush.bf16.msra.mxu0 0
          %1486 = vmatpush.bf16.msra.mxu0 0
          %1487 = vmatpush.bf16.msra.mxu0 0
          %1488 = vmatpush.bf16.msra.mxu0 0
          %1489 = vmatpush.bf16.msra.mxu0 0
          %1490 = vmatpush.bf16.msra.mxu0 %v1478
          %1491 = vmatpush.bf16.msra.mxu0 %v1477
          %1492 = vmatmul.bf16.gmra.mxu0 %v1482
          %v1493 = vpop.f32.mrf.mxu0
          %v1494 = vadd.f32 %v1468, %v1493
          %v1495 = vpop.f32.mrf.mxu0
          %1496 = vdwg.mxu0
          %1497 = vst [vmem:[%s487] sm:$0x1] %v1494
          %v1498 = vsel %vm1435, %v1427, 0.0
          %1499 = vadd.xlane.f32.xlu0 %v1498
          %v1500 = vpop.xlane.xlu0 %1499
          %v1501 = vmul.f32 %v1500, %v552
          %v1502 = vsub.f32 %v1427, %v1501
          %v1503 = vmul.f32 %v1502, %v1502
          %v1504 = vsel %vm1435, %v1503, 0.0
          %1505 = vadd.xlane.f32.xlu0 %v1504
          %v1506 = vpop.xlane.xlu0 %1505
          %v1507 = vmul.f32 %v1506, %v552
          %v1508 = vadd.f32 %v1507, 1e-06
          %v1509 = vrsqrt.pop %v1508
          %v1510 = vmul.f32 %v1509, %v1508
          %v1511 = vmul.f32 %v1510, %v1509
          %v1512 = vmul.f32 0.5, %v1511
          %v1513 = vsub.f32 1.5, %v1512
          %v1514 = vmul.f32 %v1509, %v1513
          %vm1515 = vweird.f32 %v1508
          %vm1516 = vweird.f32 %v1509
          %vm1517 = vmor %vm1515, %vm1516
          %v1518 = vsel %vm1517, %v1509, %v1514
          %v1519 = vmul.f32 %v1502, %v1518
          %v1520 = vmul.f32 %v1519, %v1434
          %v1521 = vadd.f32 %v1520, %v1460
          %v1522 = vpack.c.bf16 %v1521, %v1521
          %v1523 = vld [vmem:[%s9] sm:$0xf]
          %v1524 = vld [vmem:[%s9 + $0x4] sm:$0xf]
          %v1525 = vld [vmem:[%s9 + $0x8] sm:$0xf]
          %v1526 = vld [vmem:[%s9 + $0xc] sm:$0xf]
          %v1527 = vld [vmem:[%s10] sm:$0x1]
          %v1532 = vunpack.c.l.b16 %v1523
          %v1533 = vunpack.c.l.b16 %v1524
          %v1534 = vunpack.c.l.b16 %v1525
          %v1535 = vunpack.c.l.b16 %v1526
          %v1536 = vpack.c.b16 %v1533, %v1532
          %v1537 = vpack.c.b16 %v1535, %v1534
          %v1541 = vsel %vm539, %v1522, 0
          %1543 = vmatpush.bf16.msra.mxu0 0
          %1544 = vmatpush.bf16.msra.mxu0 0
          %1545 = vmatpush.bf16.msra.mxu0 0
          %1546 = vmatpush.bf16.msra.mxu0 0
          %1547 = vmatpush.bf16.msra.mxu0 0
          %1548 = vmatpush.bf16.msra.mxu0 0
          %1549 = vmatpush.bf16.msra.mxu0 %v1537
          %1550 = vmatpush.bf16.msra.mxu0 %v1536
          %1551 = vmatmul.bf16.gmra.mxu0 %v1541
          %v1552 = vpop.f32.mrf.mxu0
          %v1553 = vadd.f32 %v1527, %v1552
          %v1554 = vpop.f32.mrf.mxu0
          %1555 = vdwg.mxu0
          %1556 = vst [vmem:[%s487 + $0x1] sm:$0x1] %v1553
        $region72: #{dinov2_encoder_forward.1} parent=63 // pred_fallthru
          _
        %s1557 = sand.u32 %s316, 1
        %s1558 = scalar_lea.sflag [#allocation5], %s1557
        %s1559 = sand.u32 %s316, 1
        %s1560 = smul.addr %s1559, 2
        %s1561 = scalar_lea.vmem [#allocation4], %s1560
        // Predicated region
        $region73: #{dinov2_encoder_forward.1} parent=63 // pred_check
          %p1562 = pneg %p326
        $region74: #{dinov2_encoder_forward.1} parent=63 // pred_check_branch
          %1564 = sbr.rel (%p1562) target = $region76
        $region75: #{dinov2_encoder_forward.1} parent=63 // pred_region
          %1566 = vsyncadd %s1558, 0
          %s1567 = smul.addr %s29, 2
          %s1568 = scalar_lea.hbm %s11, %s1567
          %s1570 = sshll.u32 %s1561, 4
          %s1571 = int_to_ptr.vmem [resolvable:$true] %s1570
          %s1572 = sshll.u32 %s1568, 4
          %s1573 = int_to_ptr.hbm [resolvable:$true] %s1572
          %1575 = dma.vmem_to_hbm [thread:$0]  %s1571, 32, %s1573, %s1558
        $region76: #{dinov2_encoder_forward.1} parent=63 // pred_fallthru
          _
      $region64: #{dinov2_encoder_forward.1} parent=5 // pred_fallthru
        _
      %p1576 = scmp.le.s32.totalorder 2, %s20
      // Predicated region
      $region77: #{dinov2_encoder_forward.1} parent=5 // pred_check
        %p1577 = pneg %p1576
      $region78: #{dinov2_encoder_forward.1} parent=5 // pred_check_branch
        %1579 = sbr.rel (%p1577) target = $region80
      $region79: #{dinov2_encoder_forward.1} parent=5 // pred_region
        %s1580 = ssub.s32 %s20, 2
        // Predicated region
        $region81: #{dinov2_encoder_forward.1} parent=79 // pred_check
          %p1581 = pneg %p332
        $region82: #{dinov2_encoder_forward.1} parent=79 // pred_check_branch
          %1583 = sbr.rel (%p1581) target = $region84
        $region83: #{dinov2_encoder_forward.1} parent=79 // pred_region
          %s1584 = sand.u32 %s317, 1
          %s1585 = scalar_lea.sflag [#allocation5], %s1584
          %s1586 = sand.u32 %s317, 1
          %s1587 = smul.addr %s1586, 2
          %s1588 = scalar_lea.vmem [#allocation4], %s1587
          %1590 = dma.done %s1585, 32
        $region84: #{dinov2_encoder_forward.1} parent=79 // pred_fallthru
          _
      $region80: #{dinov2_encoder_forward.1} parent=5 // pred_fallthru
        _
    $region6: #{dinov2_encoder_forward.1} parent=1 // loop_footer
      %s24 = sadd.s32 1, %s20
    $region7: #{dinov2_encoder_forward.1} parent=1 // loop_footer_branch
      %19 = sbr.rel target = $region3
    $region8: #{dinov2_encoder_forward.1} parent=1 // loop_exit
      _
    %1591 = vsyncpa [#allocation5], 1
    %s1592 = scalar_lea.sflag [#allocation5], 1
    %1593 = vsyncpa %s1592, 1

</llo_original>
